<compile_context>
chip_gen: v7x
topology: tpu7x:2x2x1
jax: 0.10.0
libtpu: 0.0.40
codegen_flags: <defaults>
</compile_context>

<pallas_src>
import numpy as np
import jax
import jax.numpy as jnp
from jax.experimental import pallas as pl
from jax.experimental.pallas import tpu as pltpu

HIDDEN = 128      # param_hidden
N_HEAD = 1        # param_head  (head_dim == HIDDEN)
T = 8             # n_timestamp (shrunk for the synthetic example)
B = 2
LENGTHS = [8, 5]  # per-batch valid sequence lengths
EPS = 1e-5        # nn.LayerNorm default
LANE = 128        # TPU lane width; attention output padded to this

# Batches fused per grid step. BPG = B -> single fully-fused step (max MXU M).
# On v7x with larger B, set BPG = B // 2 so the "parallel" grid axis feeds
# both TensorCores.
BPG = B
ROWS = BPG * T    # fused GEMM M dimension per grid step


def _layer_norm(x, gamma, beta):
    mu = jnp.mean(x, axis=-1, keepdims=True)
    var = jnp.mean((x - mu) ** 2, axis=-1, keepdims=True)
    return (x - mu) * jax.lax.rsqrt(var + EPS) * gamma + beta


def _elu(x):
    return jnp.where(x > 0, x, jnp.exp(jnp.minimum(x, 0.0)) - 1.0)


def enrichment_kernel(lens_ref,                      # SMEM int32 (B,) (scalar prefetch)
                      x_ref, skip_ref,               # (ROWS, H) bf16
                      wqkv_ref, wo_ref, wglit_ref,   # bf16 weight tiles
                      wff1_ref, wff2_ref, wglig_ref, wglif_ref,
                      vec_ref,                       # (14, H) f32 bias / LN params
                      out_ref, attn_ref):            # f32 outputs
    H = HIDDEN
    base = pl.program_id(0) * BPG                    # first batch of this step

    x_bf = x_ref[...]                                # (ROWS, H) bf16
    x_f32 = x_bf.astype(jnp.float32)
    skip_f32 = skip_ref[...].astype(jnp.float32)
    vv = vec_ref[...]                                # (14, H) f32

    dot = lambda a, b: jnp.dot(a, b, preferred_element_type=jnp.float32)
    bf = lambda a: a.astype(jnp.bfloat16)

    # ---------------- Transformer_block (single head) ----------------
    # Fused QKV projection: one (ROWS,H)x(H,3H) GEMM. 1/sqrt(head_dim) is
    # already folded into the Q columns of wqkv at wrapper time.
    qkv = dot(x_bf, wqkv_ref[...])                   # (ROWS, 3H) f32
    Q = qkv[:, 0 * H:1 * H].reshape(BPG, T, H)
    K = qkv[:, 1 * H:2 * H].reshape(BPG, T, H)
    V = bf(qkv[:, 2 * H:3 * H].reshape(BPG, T, H))

    energy = jnp.einsum('bqd,bkd->bqk', bf(Q), bf(K),
                        preferred_element_type=jnp.float32)   # (BPG, T, T)

    # Key-validity mask built from SMEM lengths (no mask DMA / lane extract).
    b_iota = jax.lax.broadcasted_iota(jnp.int32, (BPG, T, T), 0)
    lens3 = jnp.full((BPG, T, T), lens_ref[base], jnp.int32)
    for b in range(1, BPG):
        lens3 = jnp.where(b_iota == b, lens_ref[base + b], lens3)
    key_pos = jax.lax.broadcasted_iota(jnp.int32, (BPG, T, T), 2)
    energy = jnp.where(key_pos < lens3, energy, jnp.float32(-1e10))

    e = jnp.exp(energy - jnp.max(energy, axis=-1, keepdims=True))
    attention = e / jnp.sum(e, axis=-1, keepdims=True)        # (BPG, T, T) f32

    # Lane-dense attention output slab: (BPG, T, LANE), zeros past key T.
    attn_ref[...] = jnp.zeros((BPG, T, LANE), jnp.float32)
    attn_ref[:, :, 0:T] = attention

    ctx = jnp.einsum('bqk,bkd->bqd', bf(attention), V,
                     preferred_element_type=jnp.float32)      # (BPG, T, H)
    # sqrt(len) applied to the (T,H) result instead of the (T,T) matrix.
    sl = jnp.sqrt(lens3[:, :, 0:1].astype(jnp.float32))       # (BPG, T, 1)
    ctx = (ctx * sl).reshape(ROWS, H)
    out_t = dot(bf(ctx), wo_ref[...])                         # fc_o (no bias)

    # ---------------- GLI_trans + skip_connector_trans ----------------
    lg = dot(bf(out_t), wglit_ref[...])                       # (ROWS, 2H) wide GEMM
    lin = lg[:, :H] + vv[0:1]
    gate = jax.nn.sigmoid(lg[:, H:] + vv[1:2])
    h = _layer_norm(lin * gate + x_f32, vv[2:3], vv[3:4])

    # ---------------- final_GRN ----------------
    a = _elu(dot(bf(h), wff1_ref[...]) + vv[4:5])
    a = dot(bf(a), wff2_ref[...]) + vv[5:6]
    lg2 = dot(bf(a), wglig_ref[...])                          # (ROWS, 2H) wide GEMM
    lin2 = lg2[:, :H] + vv[6:7]
    gate2 = jax.nn.sigmoid(lg2[:, H:] + vv[7:8])
    h2 = _layer_norm(lin2 * gate2 + h, vv[8:9], vv[9:10])

    # ---------------- GLI_final + skip_connector_final ----------------
    lg3 = dot(bf(h2), wglif_ref[...])                         # (ROWS, 2H) wide GEMM
    lin3 = lg3[:, :H] + vv[10:11]
    gate3 = jax.nn.sigmoid(lg3[:, H:] + vv[11:12])
    out_ref[...] = _layer_norm(lin3 * gate3 + skip_f32, vv[12:13], vv[13:14])


def transformer_enrichment(lens_i32, x2d, skip2d,
                           Wqkv, Wo, Wglit, Wff1, Wff2, Wglig, Wglif, vecs):
    n_steps = B // BPG
    grid_spec = pltpu.PrefetchScalarGridSpec(
        num_scalar_prefetch=1,          # lens_i32 -> SMEM, scalar path
        grid=(n_steps,),
        in_specs=[
            pl.BlockSpec((ROWS, HIDDEN), lambda m, lens: (m, 0)),          # x
            pl.BlockSpec((ROWS, HIDDEN), lambda m, lens: (m, 0)),          # skip
            # Weights: constant block index -> fetched once (no re-DMA per step).
            pl.BlockSpec((HIDDEN, 3 * HIDDEN), lambda m, lens: (0, 0)),    # W_qkv
            pl.BlockSpec((HIDDEN, HIDDEN), lambda m, lens: (0, 0)),        # W_o
            pl.BlockSpec((HIDDEN, 2 * HIDDEN), lambda m, lens: (0, 0)),    # W_gli_trans
            pl.BlockSpec((HIDDEN, HIDDEN), lambda m, lens: (0, 0)),        # W_ff1
            pl.BlockSpec((HIDDEN, HIDDEN), lambda m, lens: (0, 0)),        # W_ff2
            pl.BlockSpec((HIDDEN, 2 * HIDDEN), lambda m, lens: (0, 0)),    # W_gli_grn
            pl.BlockSpec((HIDDEN, 2 * HIDDEN), lambda m, lens: (0, 0)),    # W_gli_final
            pl.BlockSpec((14, HIDDEN), lambda m, lens: (0, 0)),            # bias/LN stack
        ],
        out_specs=[
            pl.BlockSpec((ROWS, HIDDEN), lambda m, lens: (m, 0)),          # enriched rows
            pl.BlockSpec((BPG, T, LANE), lambda m, lens: (m, 0, 0)),       # attention (lane-dense)
        ],
    )
    return pl.pallas_call(
        enrichment_kernel,
        out_shape=(jax.ShapeDtypeStruct((B * T, HIDDEN), jnp.float32),
                   jax.ShapeDtypeStruct((B, T, LANE), jnp.float32)),
        grid_spec=grid_spec,
        compiler_params=pltpu.CompilerParams(dimension_semantics=("parallel",)),
    )(lens_i32, x2d, skip2d, Wqkv, Wo, Wglit, Wff1, Wff2, Wglig, Wglif, vecs)


def _packed_order(lengths, total_len):
    # Emulates torch pack_padded_sequence(batch_first=True, enforce_sorted=False)
    # data ordering: time-major over batches sorted by descending length.
    order = sorted(range(len(lengths)), key=lambda b: -lengths[b])
    b_idx, t_idx = [], []
    for t in range(total_len):
        for b in order:
            if lengths[b] > t:
                b_idx.append(b)
                t_idx.append(t)
    return np.array(b_idx, np.int32), np.array(t_idx, np.int32)


if __name__ == "__main__":
    key = jax.random.PRNGKey(0)
    b_idx, t_idx = _packed_order(LENGTHS, T)
    n_packed = len(b_idx)

    k1, k2, kw = jax.random.split(key, 3)
    # Module inputs live in the packed domain: [sum(lengths), HIDDEN]
    x_packed = jax.random.normal(k1, (n_packed, HIDDEN), jnp.float32)
    skip_packed = jax.random.normal(k2, (n_packed, HIDDEN), jnp.float32)

    # --- deterministic parameter init ---------------------------------------
    #  0:fc_q 1:fc_k 2:fc_v 3:fc_o
    #  4:GLI_trans.linear 5:GLI_trans.gate
    #  6:GRN.ff1 7:GRN.ff2 8:GRN.GLI.linear 9:GRN.GLI.gate
    # 10:GLI_final.linear 11:GLI_final.gate      (all pre-transposed: y = x @ W)
    keys = jax.random.split(kw, 20)
    W = [0.05 * jax.random.normal(keys[i], (HIDDEN, HIDDEN), jnp.float32)
         for i in range(12)]
    biases = [0.02 * jax.random.normal(keys[12 + i], (HIDDEN,), jnp.float32)
              for i in range(8)]
    ones = jnp.ones((HIDDEN,), jnp.float32)
    zeros = jnp.zeros((HIDDEN,), jnp.float32)
    # Vector stack: biases + LayerNorm gamma/beta (PyTorch init 1/0), kept f32.
    #  0:GLI_trans.lin.b 1:GLI_trans.gate.b 2:LN_trans.g 3:LN_trans.b
    #  4:GRN.ff1.b 5:GRN.ff2.b 6:GRN.GLI.lin.b 7:GRN.GLI.gate.b 8:LN_grn.g 9:LN_grn.b
    # 10:GLI_final.lin.b 11:GLI_final.gate.b 12:LN_final.g 13:LN_final.b
    vecs = jnp.stack([biases[0], biases[1], ones, zeros,
                      biases[2], biases[3], biases[4], biases[5], ones, zeros,
                      biases[6], biases[7], ones, zeros])

    # --- wide bf16 weight tiles for the MXU ----------------------------------
    head_dim = HIDDEN // N_HEAD
    bf16 = jnp.bfloat16
    Wqkv = jnp.concatenate([W[0] / np.sqrt(head_dim), W[1], W[2]], axis=1).astype(bf16)
    Wo = W[3].astype(bf16)
    Wglit = jnp.concatenate([W[4], W[5]], axis=1).astype(bf16)
    Wff1 = W[6].astype(bf16)
    Wff2 = W[7].astype(bf16)
    Wglig = jnp.concatenate([W[8], W[9]], axis=1).astype(bf16)
    Wglif = jnp.concatenate([W[10], W[11]], axis=1).astype(bf16)

    # --- glue: pack -> padded (pack_to_sequence), flattened for fused GEMMs --
    x_padded = jnp.zeros((B, T, HIDDEN), jnp.float32).at[b_idx, t_idx].set(x_packed)
    skip_padded = jnp.zeros((B, T, HIDDEN), jnp.float32).at[b_idx, t_idx].set(skip_packed)
    x2d = x_padded.reshape(B * T, HIDDEN).astype(bf16)
    skip2d = skip_padded.reshape(B * T, HIDDEN).astype(bf16)
    lens_i32 = jnp.asarray(np.array(LENGTHS, np.int32))   # x_meta['sequence']

    out2d, attn_pad = transformer_enrichment(
        lens_i32, x2d, skip2d, Wqkv, Wo, Wglit, Wff1, Wff2, Wglig, Wglif, vecs)

    # --- glue: padded -> packed (sequence_to_pack) + attention reshape -------
    out_padded = out2d.reshape(B, T, HIDDEN)
    x_out_packed = out_padded[b_idx, t_idx]               # [sum(lengths), HIDDEN]
    transformer_att = attn_pad[:, :, :T].reshape(B, N_HEAD, T, T)

    jax.block_until_ready((x_out_packed, transformer_att))
    assert x_out_packed.shape == (n_packed, HIDDEN)
    assert transformer_att.shape == (B, N_HEAD, T, T)
    assert bool(jnp.all(jnp.isfinite(x_out_packed)))
    assert bool(jnp.all(jnp.isfinite(transformer_att)))
    print("KERNEL_OK")
</pallas_src>

<mosaic_0001>
module attributes {stable_mosaic.version = 11 : i64} {
  func.func @enrichment_kernel(%arg0: i32, %arg1: memref<2xi32, #tpu.memory_space<smem>>, %arg2: memref<16x128xbf16, #tpu.memory_space<vmem>>, %arg3: memref<16x128xbf16, #tpu.memory_space<vmem>>, %arg4: memref<128x384xbf16, #tpu.memory_space<vmem>>, %arg5: memref<128x128xbf16, #tpu.memory_space<vmem>>, %arg6: memref<128x256xbf16, #tpu.memory_space<vmem>>, %arg7: memref<128x128xbf16, #tpu.memory_space<vmem>>, %arg8: memref<128x128xbf16, #tpu.memory_space<vmem>>, %arg9: memref<128x256xbf16, #tpu.memory_space<vmem>>, %arg10: memref<128x256xbf16, #tpu.memory_space<vmem>>, %arg11: memref<14x128xf32, #tpu.memory_space<vmem>>, %arg12: memref<16x128xf32, #tpu.memory_space<vmem>>, %arg13: memref<2x8x128xf32, #tpu.memory_space<vmem>>) attributes {dimension_semantics = [#tpu.dimension_semantics<parallel>], iteration_bounds = array<i64: 1>, scalar_prefetch = 1 : i64, scratch_operands = 0 : i64, tpu.core_type = #tpu.core_type<tc>, window_params = [{transform_indices = @transform_0, window_bounds = array<i64: 16, 128>}, {transform_indices = @transform_1, window_bounds = array<i64: 16, 128>}, {pipeline_mode = #tpu.pipeline_mode<synchronous>, transform_indices = @transform_2, window_bounds = array<i64: 128, 384>}, {pipeline_mode = #tpu.pipeline_mode<synchronous>, transform_indices = @transform_3, window_bounds = array<i64: 128, 128>}, {pipeline_mode = #tpu.pipeline_mode<synchronous>, transform_indices = @transform_4, window_bounds = array<i64: 128, 256>}, {pipeline_mode = #tpu.pipeline_mode<synchronous>, transform_indices = @transform_5, window_bounds = array<i64: 128, 128>}, {pipeline_mode = #tpu.pipeline_mode<synchronous>, transform_indices = @transform_6, window_bounds = array<i64: 128, 128>}, {pipeline_mode = #tpu.pipeline_mode<synchronous>, transform_indices = @transform_7, window_bounds = array<i64: 128, 256>}, {pipeline_mode = #tpu.pipeline_mode<synchronous>, transform_indices = @transform_8, window_bounds = array<i64: 128, 256>}, {pipeline_mode = #tpu.pipeline_mode<synchronous>, transform_indices = @transform_9, window_bounds = array<i64: 14, 128>}, {transform_indices = @transform_10, window_bounds = array<i64: 16, 128>}, {transform_indices = @transform_11, window_bounds = array<i64: 2, 8, 128>}]} {
    %c2_i32 = arith.constant 2 : i32
    %0 = arith.muli %arg0, %c2_i32 : i32
    %c0 = arith.constant 0 : index
    %c0_0 = arith.constant 0 : index
    %1 = vector.load %arg2[%c0, %c0_0] : memref<16x128xbf16, #tpu.memory_space<vmem>>, vector<16x128xbf16>
    %2 = arith.extf %1 : vector<16x128xbf16> to vector<16x128xf32>
    %c0_1 = arith.constant 0 : index
    %c0_2 = arith.constant 0 : index
    %3 = vector.load %arg3[%c0_1, %c0_2] : memref<16x128xbf16, #tpu.memory_space<vmem>>, vector<16x128xbf16>
    %4 = arith.extf %3 : vector<16x128xbf16> to vector<16x128xf32>
    %c0_3 = arith.constant 0 : index
    %c0_4 = arith.constant 0 : index
    %5 = vector.load %arg11[%c0_3, %c0_4] : memref<14x128xf32, #tpu.memory_space<vmem>>, vector<14x128xf32>
    %c0_5 = arith.constant 0 : index
    %c0_6 = arith.constant 0 : index
    %6 = vector.load %arg4[%c0_5, %c0_6] : memref<128x384xbf16, #tpu.memory_space<vmem>>, vector<128x384xbf16>
    %cst = arith.constant dense<0.000000e+00> : vector<16x384xf32>
    %7 = tpu.matmul %1, %6, %cst {dimension_numbers = #tpu.dot_dimension_numbers<[1], [0], [0], [1], [0, 0, 1, 1], [], []>} : vector<16x128xbf16>, vector<128x384xbf16>, vector<16x384xf32> -> vector<16x384xf32>
    %8 = vector.extract_strided_slice %7 {offsets = [0, 0], sizes = [16, 128], strides = [1, 1]} : vector<16x384xf32> to vector<16x128xf32>
    %9 = vector.shape_cast %8 : vector<16x128xf32> to vector<2x8x128xf32>
    %10 = vector.extract_strided_slice %7 {offsets = [0, 128], sizes = [16, 128], strides = [1, 1]} : vector<16x384xf32> to vector<16x128xf32>
    %11 = vector.shape_cast %10 : vector<16x128xf32> to vector<2x8x128xf32>
    %12 = vector.extract_strided_slice %7 {offsets = [0, 256], sizes = [16, 128], strides = [1, 1]} : vector<16x384xf32> to vector<16x128xf32>
    %13 = vector.shape_cast %12 : vector<16x128xf32> to vector<2x8x128xf32>
    %14 = arith.truncf %13 : vector<2x8x128xf32> to vector<2x8x128xbf16>
    %15 = arith.truncf %9 : vector<2x8x128xf32> to vector<2x8x128xbf16>
    %16 = arith.truncf %11 : vector<2x8x128xf32> to vector<2x8x128xbf16>
    "tpu.trace_start"() <{level = 10 : i32, message = "bqd,bkd->bqk"}> : () -> ()
    %cst_7 = arith.constant dense<0.000000e+00> : vector<2x8x8xf32>
    %17 = tpu.matmul %15, %16, %cst_7 {dimension_numbers = #tpu.dot_dimension_numbers<[2], [2], [1], [1], [0, 0, 0, 1, 1, 1], [0], [0]>} : vector<2x8x128xbf16>, vector<2x8x128xbf16>, vector<2x8x8xf32> -> vector<2x8x8xf32>
    "tpu.trace_stop"() : () -> ()
    %18 = tpu.iota {dimensions = array<i32: 0>} : vector<2x8x8xi32>
    %19 = arith.index_cast %0 : i32 to index
    %20 = memref.load %arg1[%19] : memref<2xi32, #tpu.memory_space<smem>>
    %21 = vector.broadcast %20 : i32 to vector<2x8x8xi32>
    %c1_i32 = arith.constant 1 : i32
    %22 = vector.broadcast %c1_i32 : i32 to vector<2x8x8xi32>
    %23 = arith.cmpi eq, %18, %22 : vector<2x8x8xi32>
    %c1_i32_8 = arith.constant 1 : i32
    %24 = arith.addi %0, %c1_i32_8 : i32
    %25 = arith.index_cast %24 : i32 to index
    %26 = memref.load %arg1[%25] : memref<2xi32, #tpu.memory_space<smem>>
    %27 = vector.broadcast %26 : i32 to vector<2x8x8xi32>
    %28 = arith.select %23, %27, %21 : vector<2x8x8xi1>, vector<2x8x8xi32>
    %29 = tpu.iota {dimensions = array<i32: 2>} : vector<2x8x8xi32>
    %30 = arith.cmpi slt, %29, %28 : vector<2x8x8xi32>
    %cst_9 = arith.constant -1.000000e+10 : f32
    %31 = vector.broadcast %cst_9 : f32 to vector<2x8x8xf32>
    %32 = arith.select %30, %17, %31 : vector<2x8x8xi1>, vector<2x8x8xf32>
    %cst_10 = arith.constant dense<0xFF800000> : vector<2x8xf32>
    %33 = vector.multi_reduction <maximumf>, %32, %cst_10 [2] : vector<2x8x8xf32> to vector<2x8xf32>
    %34 = vector.shape_cast %33 : vector<2x8xf32> to vector<2x8x1xf32>
    %35 = vector.broadcast %34 : vector<2x8x1xf32> to vector<2x8x8xf32>
    %36 = arith.subf %32, %35 : vector<2x8x8xf32>
    %37 = math.exp %36 : vector<2x8x8xf32>
    %cst_11 = arith.constant dense<0.000000e+00> : vector<2x8xf32>
    %38 = vector.multi_reduction <add>, %37, %cst_11 [2] : vector<2x8x8xf32> to vector<2x8xf32>
    %39 = vector.shape_cast %38 : vector<2x8xf32> to vector<2x8x1xf32>
    %40 = vector.broadcast %39 : vector<2x8x1xf32> to vector<2x8x8xf32>
    %41 = arith.divf %37, %40 : vector<2x8x8xf32>
    %cst_12 = arith.constant 0.000000e+00 : f32
    %42 = vector.broadcast %cst_12 : f32 to vector<2x8x128xf32>
    %c0_13 = arith.constant 0 : index
    %c0_14 = arith.constant 0 : index
    %c0_15 = arith.constant 0 : index
    %43 = vector.load %arg13[%c0_13, %c0_14, %c0_15] : memref<2x8x128xf32, #tpu.memory_space<vmem>>, vector<2x8x128xf32>
    tpu.vector_store %arg13[%c0_13, %c0_14, %c0_15], %42 {strides = array<i32>} : memref<2x8x128xf32, #tpu.memory_space<vmem>>, vector<2x8x128xf32>,
    %c0_16 = arith.constant 0 : index
    %c0_17 = arith.constant 0 : index
    %c0_18 = arith.constant 0 : index
    %44 = vector.load %arg13[%c0_16, %c0_17, %c0_18] : memref<2x8x128xf32, #tpu.memory_space<vmem>>, vector<2x8x8xf32>
    tpu.vector_store %arg13[%c0_16, %c0_17, %c0_18], %41 {strides = array<i32>} : memref<2x8x128xf32, #tpu.memory_space<vmem>>, vector<2x8x8xf32>,
    %45 = arith.truncf %41 : vector<2x8x8xf32> to vector<2x8x8xbf16>
    "tpu.trace_start"() <{level = 10 : i32, message = "bqk,bkd->bqd"}> : () -> ()
    %cst_19 = arith.constant dense<0.000000e+00> : vector<2x8x128xf32>
    %46 = tpu.matmul %45, %14, %cst_19 {dimension_numbers = #tpu.dot_dimension_numbers<[2], [1], [1], [2], [0, 0, 0, 1, 1, 2], [0], [0]>} : vector<2x8x8xbf16>, vector<2x8x128xbf16>, vector<2x8x128xf32> -> vector<2x8x128xf32>
    "tpu.trace_stop"() : () -> ()
    %47 = vector.extract_strided_slice %28 {offsets = [0, 0, 0], sizes = [2, 8, 1], strides = [1, 1, 1]} : vector<2x8x8xi32> to vector<2x8x1xi32>
    %48 = arith.sitofp %47 : vector<2x8x1xi32> to vector<2x8x1xf32>
    %49 = math.sqrt %48 : vector<2x8x1xf32>
    %50 = vector.broadcast %49 : vector<2x8x1xf32> to vector<2x8x128xf32>
    %51 = arith.mulf %46, %50 : vector<2x8x128xf32>
    %52 = vector.shape_cast %51 : vector<2x8x128xf32> to vector<16x128xf32>
    %53 = arith.truncf %52 : vector<16x128xf32> to vector<16x128xbf16>
    %c0_20 = arith.constant 0 : index
    %c0_21 = arith.constant 0 : index
    %54 = vector.load %arg5[%c0_20, %c0_21] : memref<128x128xbf16, #tpu.memory_space<vmem>>, vector<128x128xbf16>
    %cst_22 = arith.constant dense<0.000000e+00> : vector<16x128xf32>
    %55 = tpu.matmul %53, %54, %cst_22 {dimension_numbers = #tpu.dot_dimension_numbers<[1], [0], [0], [1], [0, 0, 1, 1], [], []>} : vector<16x128xbf16>, vector<128x128xbf16>, vector<16x128xf32> -> vector<16x128xf32>
    %56 = arith.truncf %55 : vector<16x128xf32> to vector<16x128xbf16>
    %c0_23 = arith.constant 0 : index
    %c0_24 = arith.constant 0 : index
    %57 = vector.load %arg6[%c0_23, %c0_24] : memref<128x256xbf16, #tpu.memory_space<vmem>>, vector<128x256xbf16>
    %cst_25 = arith.constant dense<0.000000e+00> : vector<16x256xf32>
    %58 = tpu.matmul %56, %57, %cst_25 {dimension_numbers = #tpu.dot_dimension_numbers<[1], [0], [0], [1], [0, 0, 1, 1], [], []>} : vector<16x128xbf16>, vector<128x256xbf16>, vector<16x256xf32> -> vector<16x256xf32>
    %59 = vector.extract_strided_slice %58 {offsets = [0, 0], sizes = [16, 128], strides = [1, 1]} : vector<16x256xf32> to vector<16x128xf32>
    %60 = vector.extract_strided_slice %5 {offsets = [0, 0], sizes = [1, 128], strides = [1, 1]} : vector<14x128xf32> to vector<1x128xf32>
    %61 = vector.broadcast %60 : vector<1x128xf32> to vector<16x128xf32>
    %62 = arith.addf %59, %61 : vector<16x128xf32>
    %63 = vector.extract_strided_slice %58 {offsets = [0, 128], sizes = [16, 128], strides = [1, 1]} : vector<16x256xf32> to vector<16x128xf32>
    %64 = vector.extract_strided_slice %5 {offsets = [1, 0], sizes = [1, 128], strides = [1, 1]} : vector<14x128xf32> to vector<1x128xf32>
    %65 = vector.broadcast %64 : vector<1x128xf32> to vector<16x128xf32>
    %66 = arith.addf %63, %65 : vector<16x128xf32>
    %67 = arith.negf %66 : vector<16x128xf32>
    %68 = math.exp %67 : vector<16x128xf32>
    %cst_26 = arith.constant 1.000000e+00 : f32
    %69 = vector.broadcast %cst_26 : f32 to vector<16x128xf32>
    %70 = arith.addf %69, %68 : vector<16x128xf32>
    %71 = arith.divf %69, %70 : vector<16x128xf32>
    %72 = arith.mulf %62, %71 : vector<16x128xf32>
    %73 = arith.addf %72, %2 : vector<16x128xf32>
    %74 = vector.extract_strided_slice %5 {offsets = [2, 0], sizes = [1, 128], strides = [1, 1]} : vector<14x128xf32> to vector<1x128xf32>
    %75 = vector.extract_strided_slice %5 {offsets = [3, 0], sizes = [1, 128], strides = [1, 1]} : vector<14x128xf32> to vector<1x128xf32>
    %cst_27 = arith.constant dense<0.000000e+00> : vector<16xf32>
    %76 = vector.multi_reduction <add>, %73, %cst_27 [1] : vector<16x128xf32> to vector<16xf32>
    %77 = vector.shape_cast %76 : vector<16xf32> to vector<16x1xf32>
    %cst_28 = arith.constant 1.280000e+02 : f32
    %78 = vector.broadcast %cst_28 : f32 to vector<16x1xf32>
    %79 = arith.divf %77, %78 : vector<16x1xf32>
    %80 = vector.broadcast %79 : vector<16x1xf32> to vector<16x128xf32>
    %81 = arith.subf %73, %80 : vector<16x128xf32>
    %82 = arith.mulf %81, %81 : vector<16x128xf32>
    %cst_29 = arith.constant dense<0.000000e+00> : vector<16xf32>
    %83 = vector.multi_reduction <add>, %82, %cst_29 [1] : vector<16x128xf32> to vector<16xf32>
    %84 = vector.shape_cast %83 : vector<16xf32> to vector<16x1xf32>
    %cst_30 = arith.constant 1.280000e+02 : f32
    %85 = vector.broadcast %cst_30 : f32 to vector<16x1xf32>
    %86 = arith.divf %84, %85 : vector<16x1xf32>
    %87 = vector.broadcast %79 : vector<16x1xf32> to vector<16x128xf32>
    %88 = arith.subf %73, %87 : vector<16x128xf32>
    %cst_31 = arith.constant 9.99999974E-6 : f32
    %89 = vector.broadcast %cst_31 : f32 to vector<16x1xf32>
    %90 = arith.addf %86, %89 : vector<16x1xf32>
    %91 = math.rsqrt %90 : vector<16x1xf32>
    %92 = vector.broadcast %91 : vector<16x1xf32> to vector<16x128xf32>
    %93 = arith.mulf %88, %92 : vector<16x128xf32>
    %94 = vector.broadcast %74 : vector<1x128xf32> to vector<16x128xf32>
    %95 = arith.mulf %93, %94 : vector<16x128xf32>
    %96 = vector.broadcast %75 : vector<1x128xf32> to vector<16x128xf32>
    %97 = arith.addf %95, %96 : vector<16x128xf32>
    %98 = arith.truncf %97 : vector<16x128xf32> to vector<16x128xbf16>
    %c0_32 = arith.constant 0 : index
    %c0_33 = arith.constant 0 : index
    %99 = vector.load %arg7[%c0_32, %c0_33] : memref<128x128xbf16, #tpu.memory_space<vmem>>, vector<128x128xbf16>
    %cst_34 = arith.constant dense<0.000000e+00> : vector<16x128xf32>
    %100 = tpu.matmul %98, %99, %cst_34 {dimension_numbers = #tpu.dot_dimension_numbers<[1], [0], [0], [1], [0, 0, 1, 1], [], []>} : vector<16x128xbf16>, vector<128x128xbf16>, vector<16x128xf32> -> vector<16x128xf32>
    %101 = vector.extract_strided_slice %5 {offsets = [4, 0], sizes = [1, 128], strides = [1, 1]} : vector<14x128xf32> to vector<1x128xf32>
    %102 = vector.broadcast %101 : vector<1x128xf32> to vector<16x128xf32>
    %103 = arith.addf %100, %102 : vector<16x128xf32>
    %cst_35 = arith.constant 0.000000e+00 : f32
    %104 = vector.broadcast %cst_35 : f32 to vector<16x128xf32>
    %105 = arith.cmpf ogt, %103, %104 : vector<16x128xf32>
    %cst_36 = arith.constant 0.000000e+00 : f32
    %106 = vector.broadcast %cst_36 : f32 to vector<16x128xf32>
    %107 = arith.minimumf %103, %106 : vector<16x128xf32>
    %108 = math.exp %107 : vector<16x128xf32>
    %cst_37 = arith.constant 1.000000e+00 : f32
    %109 = vector.broadcast %cst_37 : f32 to vector<16x128xf32>
    %110 = arith.subf %108, %109 : vector<16x128xf32>
    %111 = arith.select %105, %103, %110 : vector<16x128xi1>, vector<16x128xf32>
    %112 = arith.truncf %111 : vector<16x128xf32> to vector<16x128xbf16>
    %c0_38 = arith.constant 0 : index
    %c0_39 = arith.constant 0 : index
    %113 = vector.load %arg8[%c0_38, %c0_39] : memref<128x128xbf16, #tpu.memory_space<vmem>>, vector<128x128xbf16>
    %cst_40 = arith.constant dense<0.000000e+00> : vector<16x128xf32>
    %114 = tpu.matmul %112, %113, %cst_40 {dimension_numbers = #tpu.dot_dimension_numbers<[1], [0], [0], [1], [0, 0, 1, 1], [], []>} : vector<16x128xbf16>, vector<128x128xbf16>, vector<16x128xf32> -> vector<16x128xf32>
    %115 = vector.extract_strided_slice %5 {offsets = [5, 0], sizes = [1, 128], strides = [1, 1]} : vector<14x128xf32> to vector<1x128xf32>
    %116 = vector.broadcast %115 : vector<1x128xf32> to vector<16x128xf32>
    %117 = arith.addf %114, %116 : vector<16x128xf32>
    %118 = arith.truncf %117 : vector<16x128xf32> to vector<16x128xbf16>
    %c0_41 = arith.constant 0 : index
    %c0_42 = arith.constant 0 : index
    %119 = vector.load %arg9[%c0_41, %c0_42] : memref<128x256xbf16, #tpu.memory_space<vmem>>, vector<128x256xbf16>
    %cst_43 = arith.constant dense<0.000000e+00> : vector<16x256xf32>
    %120 = tpu.matmul %118, %119, %cst_43 {dimension_numbers = #tpu.dot_dimension_numbers<[1], [0], [0], [1], [0, 0, 1, 1], [], []>} : vector<16x128xbf16>, vector<128x256xbf16>, vector<16x256xf32> -> vector<16x256xf32>
    %121 = vector.extract_strided_slice %120 {offsets = [0, 0], sizes = [16, 128], strides = [1, 1]} : vector<16x256xf32> to vector<16x128xf32>
    %122 = vector.extract_strided_slice %5 {offsets = [6, 0], sizes = [1, 128], strides = [1, 1]} : vector<14x128xf32> to vector<1x128xf32>
    %123 = vector.broadcast %122 : vector<1x128xf32> to vector<16x128xf32>
    %124 = arith.addf %121, %123 : vector<16x128xf32>
    %125 = vector.extract_strided_slice %120 {offsets = [0, 128], sizes = [16, 128], strides = [1, 1]} : vector<16x256xf32> to vector<16x128xf32>
    %126 = vector.extract_strided_slice %5 {offsets = [7, 0], sizes = [1, 128], strides = [1, 1]} : vector<14x128xf32> to vector<1x128xf32>
    %127 = vector.broadcast %126 : vector<1x128xf32> to vector<16x128xf32>
    %128 = arith.addf %125, %127 : vector<16x128xf32>
    %129 = arith.negf %128 : vector<16x128xf32>
    %130 = math.exp %129 : vector<16x128xf32>
    %cst_44 = arith.constant 1.000000e+00 : f32
    %131 = vector.broadcast %cst_44 : f32 to vector<16x128xf32>
    %132 = arith.addf %131, %130 : vector<16x128xf32>
    %133 = arith.divf %131, %132 : vector<16x128xf32>
    %134 = arith.mulf %124, %133 : vector<16x128xf32>
    %135 = arith.addf %134, %97 : vector<16x128xf32>
    %136 = vector.extract_strided_slice %5 {offsets = [8, 0], sizes = [1, 128], strides = [1, 1]} : vector<14x128xf32> to vector<1x128xf32>
    %137 = vector.extract_strided_slice %5 {offsets = [9, 0], sizes = [1, 128], strides = [1, 1]} : vector<14x128xf32> to vector<1x128xf32>
    %cst_45 = arith.constant dense<0.000000e+00> : vector<16xf32>
    %138 = vector.multi_reduction <add>, %135, %cst_45 [1] : vector<16x128xf32> to vector<16xf32>
    %139 = vector.shape_cast %138 : vector<16xf32> to vector<16x1xf32>
    %cst_46 = arith.constant 1.280000e+02 : f32
    %140 = vector.broadcast %cst_46 : f32 to vector<16x1xf32>
    %141 = arith.divf %139, %140 : vector<16x1xf32>
    %142 = vector.broadcast %141 : vector<16x1xf32> to vector<16x128xf32>
    %143 = arith.subf %135, %142 : vector<16x128xf32>
    %144 = arith.mulf %143, %143 : vector<16x128xf32>
    %cst_47 = arith.constant dense<0.000000e+00> : vector<16xf32>
    %145 = vector.multi_reduction <add>, %144, %cst_47 [1] : vector<16x128xf32> to vector<16xf32>
    %146 = vector.shape_cast %145 : vector<16xf32> to vector<16x1xf32>
    %cst_48 = arith.constant 1.280000e+02 : f32
    %147 = vector.broadcast %cst_48 : f32 to vector<16x1xf32>
    %148 = arith.divf %146, %147 : vector<16x1xf32>
    %149 = vector.broadcast %141 : vector<16x1xf32> to vector<16x128xf32>
    %150 = arith.subf %135, %149 : vector<16x128xf32>
    %cst_49 = arith.constant 9.99999974E-6 : f32
    %151 = vector.broadcast %cst_49 : f32 to vector<16x1xf32>
    %152 = arith.addf %148, %151 : vector<16x1xf32>
    %153 = math.rsqrt %152 : vector<16x1xf32>
    %154 = vector.broadcast %153 : vector<16x1xf32> to vector<16x128xf32>
    %155 = arith.mulf %150, %154 : vector<16x128xf32>
    %156 = vector.broadcast %136 : vector<1x128xf32> to vector<16x128xf32>
    %157 = arith.mulf %155, %156 : vector<16x128xf32>
    %158 = vector.broadcast %137 : vector<1x128xf32> to vector<16x128xf32>
    %159 = arith.addf %157, %158 : vector<16x128xf32>
    %160 = arith.truncf %159 : vector<16x128xf32> to vector<16x128xbf16>
    %c0_50 = arith.constant 0 : index
    %c0_51 = arith.constant 0 : index
    %161 = vector.load %arg10[%c0_50, %c0_51] : memref<128x256xbf16, #tpu.memory_space<vmem>>, vector<128x256xbf16>
    %cst_52 = arith.constant dense<0.000000e+00> : vector<16x256xf32>
    %162 = tpu.matmul %160, %161, %cst_52 {dimension_numbers = #tpu.dot_dimension_numbers<[1], [0], [0], [1], [0, 0, 1, 1], [], []>} : vector<16x128xbf16>, vector<128x256xbf16>, vector<16x256xf32> -> vector<16x256xf32>
    %163 = vector.extract_strided_slice %162 {offsets = [0, 0], sizes = [16, 128], strides = [1, 1]} : vector<16x256xf32> to vector<16x128xf32>
    %164 = vector.extract_strided_slice %5 {offsets = [10, 0], sizes = [1, 128], strides = [1, 1]} : vector<14x128xf32> to vector<1x128xf32>
    %165 = vector.broadcast %164 : vector<1x128xf32> to vector<16x128xf32>
    %166 = arith.addf %163, %165 : vector<16x128xf32>
    %167 = vector.extract_strided_slice %162 {offsets = [0, 128], sizes = [16, 128], strides = [1, 1]} : vector<16x256xf32> to vector<16x128xf32>
    %168 = vector.extract_strided_slice %5 {offsets = [11, 0], sizes = [1, 128], strides = [1, 1]} : vector<14x128xf32> to vector<1x128xf32>
    %169 = vector.broadcast %168 : vector<1x128xf32> to vector<16x128xf32>
    %170 = arith.addf %167, %169 : vector<16x128xf32>
    %171 = arith.negf %170 : vector<16x128xf32>
    %172 = math.exp %171 : vector<16x128xf32>
    %cst_53 = arith.constant 1.000000e+00 : f32
    %173 = vector.broadcast %cst_53 : f32 to vector<16x128xf32>
    %174 = arith.addf %173, %172 : vector<16x128xf32>
    %175 = arith.divf %173, %174 : vector<16x128xf32>
    %176 = arith.mulf %166, %175 : vector<16x128xf32>
    %177 = arith.addf %176, %4 : vector<16x128xf32>
    %178 = vector.extract_strided_slice %5 {offsets = [12, 0], sizes = [1, 128], strides = [1, 1]} : vector<14x128xf32> to vector<1x128xf32>
    %179 = vector.extract_strided_slice %5 {offsets = [13, 0], sizes = [1, 128], strides = [1, 1]} : vector<14x128xf32> to vector<1x128xf32>
    %cst_54 = arith.constant dense<0.000000e+00> : vector<16xf32>
    %180 = vector.multi_reduction <add>, %177, %cst_54 [1] : vector<16x128xf32> to vector<16xf32>
    %181 = vector.shape_cast %180 : vector<16xf32> to vector<16x1xf32>
    %cst_55 = arith.constant 1.280000e+02 : f32
    %182 = vector.broadcast %cst_55 : f32 to vector<16x1xf32>
    %183 = arith.divf %181, %182 : vector<16x1xf32>
    %184 = vector.broadcast %183 : vector<16x1xf32> to vector<16x128xf32>
    %185 = arith.subf %177, %184 : vector<16x128xf32>
    %186 = arith.mulf %185, %185 : vector<16x128xf32>
    %cst_56 = arith.constant dense<0.000000e+00> : vector<16xf32>
    %187 = vector.multi_reduction <add>, %186, %cst_56 [1] : vector<16x128xf32> to vector<16xf32>
    %188 = vector.shape_cast %187 : vector<16xf32> to vector<16x1xf32>
    %cst_57 = arith.constant 1.280000e+02 : f32
    %189 = vector.broadcast %cst_57 : f32 to vector<16x1xf32>
    %190 = arith.divf %188, %189 : vector<16x1xf32>
    %191 = vector.broadcast %183 : vector<16x1xf32> to vector<16x128xf32>
    %192 = arith.subf %177, %191 : vector<16x128xf32>
    %cst_58 = arith.constant 9.99999974E-6 : f32
    %193 = vector.broadcast %cst_58 : f32 to vector<16x1xf32>
    %194 = arith.addf %190, %193 : vector<16x1xf32>
    %195 = math.rsqrt %194 : vector<16x1xf32>
    %196 = vector.broadcast %195 : vector<16x1xf32> to vector<16x128xf32>
    %197 = arith.mulf %192, %196 : vector<16x128xf32>
    %198 = vector.broadcast %178 : vector<1x128xf32> to vector<16x128xf32>
    %199 = arith.mulf %197, %198 : vector<16x128xf32>
    %200 = vector.broadcast %179 : vector<1x128xf32> to vector<16x128xf32>
    %201 = arith.addf %199, %200 : vector<16x128xf32>
    %c0_59 = arith.constant 0 : index
    %c0_60 = arith.constant 0 : index
    %202 = vector.load %arg12[%c0_59, %c0_60] : memref<16x128xf32, #tpu.memory_space<vmem>>, vector<16x128xf32>
    tpu.vector_store %arg12[%c0_59, %c0_60], %201 {strides = array<i32>} : memref<16x128xf32, #tpu.memory_space<vmem>>, vector<16x128xf32>,
    return
  }
  func.func @transform_0(%arg0: i32, %arg1: memref<2xi32, #tpu.memory_space<smem>>) -> (i32, i32) {
    %c0_i32 = arith.constant 0 : i32
    %c0_i32_0 = arith.constant 0 : i32
    return %arg0, %c0_i32 : i32, i32
  }
  func.func @transform_1(%arg0: i32, %arg1: memref<2xi32, #tpu.memory_space<smem>>) -> (i32, i32) {
    %c0_i32 = arith.constant 0 : i32
    %c0_i32_0 = arith.constant 0 : i32
    return %arg0, %c0_i32 : i32, i32
  }
  func.func @transform_2(%arg0: i32, %arg1: memref<2xi32, #tpu.memory_space<smem>>) -> (i32, i32) {
    %c0_i32 = arith.constant 0 : i32
    %c0_i32_0 = arith.constant 0 : i32
    %c0_i32_1 = arith.constant 0 : i32
    return %c0_i32, %c0_i32_0 : i32, i32
  }
  func.func @transform_3(%arg0: i32, %arg1: memref<2xi32, #tpu.memory_space<smem>>) -> (i32, i32) {
    %c0_i32 = arith.constant 0 : i32
    %c0_i32_0 = arith.constant 0 : i32
    %c0_i32_1 = arith.constant 0 : i32
    return %c0_i32, %c0_i32_0 : i32, i32
  }
  func.func @transform_4(%arg0: i32, %arg1: memref<2xi32, #tpu.memory_space<smem>>) -> (i32, i32) {
    %c0_i32 = arith.constant 0 : i32
    %c0_i32_0 = arith.constant 0 : i32
    %c0_i32_1 = arith.constant 0 : i32
    return %c0_i32, %c0_i32_0 : i32, i32
  }
  func.func @transform_5(%arg0: i32, %arg1: memref<2xi32, #tpu.memory_space<smem>>) -> (i32, i32) {
    %c0_i32 = arith.constant 0 : i32
    %c0_i32_0 = arith.constant 0 : i32
    %c0_i32_1 = arith.constant 0 : i32
    return %c0_i32, %c0_i32_0 : i32, i32
  }
  func.func @transform_6(%arg0: i32, %arg1: memref<2xi32, #tpu.memory_space<smem>>) -> (i32, i32) {
    %c0_i32 = arith.constant 0 : i32
    %c0_i32_0 = arith.constant 0 : i32
    %c0_i32_1 = arith.constant 0 : i32
    return %c0_i32, %c0_i32_0 : i32, i32
  }
  func.func @transform_7(%arg0: i32, %arg1: memref<2xi32, #tpu.memory_space<smem>>) -> (i32, i32) {
    %c0_i32 = arith.constant 0 : i32
    %c0_i32_0 = arith.constant 0 : i32
    %c0_i32_1 = arith.constant 0 : i32
    return %c0_i32, %c0_i32_0 : i32, i32
  }
  func.func @transform_8(%arg0: i32, %arg1: memref<2xi32, #tpu.memory_space<smem>>) -> (i32, i32) {
    %c0_i32 = arith.constant 0 : i32
    %c0_i32_0 = arith.constant 0 : i32
    %c0_i32_1 = arith.constant 0 : i32
    return %c0_i32, %c0_i32_0 : i32, i32
  }
  func.func @transform_9(%arg0: i32, %arg1: memref<2xi32, #tpu.memory_space<smem>>) -> (i32, i32) {
    %c0_i32 = arith.constant 0 : i32
    %c0_i32_0 = arith.constant 0 : i32
    %c0_i32_1 = arith.constant 0 : i32
    return %c0_i32, %c0_i32_0 : i32, i32
  }
  func.func @transform_10(%arg0: i32, %arg1: memref<2xi32, #tpu.memory_space<smem>>) -> (i32, i32) {
    %c0_i32 = arith.constant 0 : i32
    %c0_i32_0 = arith.constant 0 : i32
    return %arg0, %c0_i32 : i32, i32
  }
  func.func @transform_11(%arg0: i32, %arg1: memref<2xi32, #tpu.memory_space<smem>>) -> (i32, i32, i32) {
    %c0_i32 = arith.constant 0 : i32
    %c0_i32_0 = arith.constant 0 : i32
    %c0_i32_1 = arith.constant 0 : i32
    return %arg0, %c0_i32, %c0_i32_0 : i32, i32, i32
  }
}

</mosaic_0001>

<llo_original>
// kernel: tpu_custom_call.1
$region0: #{tpu_custom_call.1}
  #allocation0 [shape = 'u32[]', space=smem, size = 0x4, offset = 0x4, fixed_abs, tag = 'smem constant byte address 0x4 - core index']
  #allocation1 [shape = 'u32[144,128]{1,0:T(1,128)}', space=vmem, size = 0x12000, scoped, tag = 'internal scratch']
  #allocation2 [shape = 's32[1]{0}', space=sflag, size = 0x4, scoped, tag = 'scoped memory for tpu_custom_call.1']
  #allocation3 [shape = 'u8[512]{0}', space=smem, size = 0x200, scoped, tag = 'prefetched SMEM operand 0']
  %s0 = inlined_call_operand.hbm [shape: s32[2], index: 0, kind: input, shape index: {}]
  %s1 = inlined_call_operand.hbm [shape: bf16[16,128], index: 1, kind: input, shape index: {}]
  %s2 = inlined_call_operand.hbm [shape: bf16[16,128], index: 2, kind: input, shape index: {}]
  %s3 = inlined_call_operand.hbm [shape: bf16[128,384], index: 3, kind: input, shape index: {}]
  %s4 = inlined_call_operand.hbm [shape: bf16[128,128], index: 4, kind: input, shape index: {}]
  %s5 = inlined_call_operand.hbm [shape: bf16[128,256], index: 5, kind: input, shape index: {}]
  %s6 = inlined_call_operand.hbm [shape: bf16[128,128], index: 6, kind: input, shape index: {}]
  %s7 = inlined_call_operand.hbm [shape: bf16[128,128], index: 7, kind: input, shape index: {}]
  %s8 = inlined_call_operand.hbm [shape: bf16[128,256], index: 8, kind: input, shape index: {}]
  %s9 = inlined_call_operand.hbm [shape: bf16[128,256], index: 9, kind: input, shape index: {}]
  %s10 = inlined_call_operand.vmem [shape: f32[14,128], index: 10, kind: input, shape index: {}]
  %s11 = inlined_call_operand.hbm [shape: f32[16,128], index: 11, kind: output, shape index: {0}]
  %s12 = inlined_call_operand.hbm [shape: f32[2,8,128], index: 12, kind: output, shape index: {1}]
  %13 = xla_tuple %s11, %s12
  %s14 = sld [smem:[#allocation0]]
  $region94: #{tpu_custom_call.1} parent=0
    _
  %s16 = ssub.s32 1, %s14
  %s17 = scalar_select 0, %s16, %s14
  %19 = dma.hbm_to_smem %s0, 16, [#allocation3], [#allocation2]
  %20 = dma.done [#allocation2], 16
  %21 = sfence
  $region1: #{tpu_custom_call.1} parent=0
    #allocation4 [shape = 'u8[4096]{0}', space=vmem, size = 0x1000, scoped, tag = 'input window, operand 1, single buffered']
    #allocation5 [shape = 's32[1]{0}', space=sflag, size = 0x4, scoped, tag = 'scoped memory for tpu_custom_call.1']
    #allocation6 [shape = 's32[1]{0}', space=sflag, size = 0x4, scoped, tag = 'scoped memory for tpu_custom_call.1']
    #allocation7 [shape = 'u8[4096]{0}', space=vmem, size = 0x1000, scoped, tag = 'input window, operand 2, single buffered']
    #allocation8 [shape = 's32[1]{0}', space=sflag, size = 0x4, scoped, tag = 'scoped memory for tpu_custom_call.1']
    #allocation9 [shape = 'u8[98304]{0}', space=vmem, size = 0x18000, scoped, tag = 'input window, operand 3, single buffered']
    #allocation10 [shape = 'u8[32768]{0}', space=vmem, size = 0x8000, scoped, tag = 'input window, operand 4, single buffered']
    #allocation11 [shape = 's32[1]{0}', space=sflag, size = 0x4, scoped, tag = 'scoped memory for tpu_custom_call.1']
    #allocation12 [shape = 'u8[65536]{0}', space=vmem, size = 0x10000, scoped, tag = 'input window, operand 5, single buffered']
    #allocation13 [shape = 'u8[32768]{0}', space=vmem, size = 0x8000, scoped, tag = 'input window, operand 6, single buffered']
    #allocation14 [shape = 's32[1]{0}', space=sflag, size = 0x4, scoped, tag = 'scoped memory for tpu_custom_call.1']
    #allocation15 [shape = 'u8[32768]{0}', space=vmem, size = 0x8000, scoped, tag = 'input window, operand 7, single buffered']
    #allocation16 [shape = 'u8[65536]{0}', space=vmem, size = 0x10000, scoped, tag = 'input window, operand 8, single buffered']
    #allocation17 [shape = 's32[1]{0}', space=sflag, size = 0x4, scoped, tag = 'scoped memory for tpu_custom_call.1']
    #allocation18 [shape = 'u8[65536]{0}', space=vmem, size = 0x10000, scoped, tag = 'input window, operand 9, single buffered']
    #allocation19 [shape = 'u8[8192]{0}', space=vmem, size = 0x2000, scoped, tag = 'output window, operand 0, single buffered']
    #allocation20 [shape = 'u8[8192]{0}', space=vmem, size = 0x2000, scoped, tag = 'output window, operand 1, single buffered']
    #allocation21 [shape = 's32[1]{0}', space=sflag, size = 0x4, scoped, tag = 'scoped memory for tpu_custom_call.1']
    %22 = vsyncpa [#allocation5], 0
    %23 = vsyncpa [#allocation8], 0
    %24 = vsyncpa [#allocation11], 0
    %25 = vsyncpa [#allocation14], 0
    %26 = vsyncpa [#allocation17], 0
    %27 = vsyncpa [#allocation6], 0
    %28 = vsyncpa [#allocation21], 0
    // Predicated region
    $region2: #{tpu_custom_call.1} parent=1 // pred_check
      _
    $region3: #{tpu_custom_call.1} parent=1 // pred_check_branch
      %30 = sbr.rel (0) target = $region5
    $region4: #{tpu_custom_call.1} parent=1 // pred_region
      %s32 = ssub.s32 128, 128
      %33 = vsyncadd [#allocation5], %s32
      %s34 = sshll.u32 [#allocation4], 4
      %s35 = int_to_ptr.vmem [resolvable:$true] %s34
      %40 = dma.hbm_to_vmem [thread:$0]  %s1, 128, %s35, [#allocation5], 64, 64, 4
    $region5: #{tpu_custom_call.1} parent=1 // pred_fallthru
      _
    // Predicated region
    $region6: #{tpu_custom_call.1} parent=1 // pred_check
      _
    $region7: #{tpu_custom_call.1} parent=1 // pred_check_branch
      %42 = sbr.rel (0) target = $region9
    $region8: #{tpu_custom_call.1} parent=1 // pred_region
      %s44 = ssub.s32 128, 128
      %45 = vsyncadd [#allocation8], %s44
      %s46 = sshll.u32 [#allocation7], 4
      %s47 = int_to_ptr.vmem [resolvable:$true] %s46
      %52 = dma.hbm_to_vmem [thread:$0]  %s2, 128, %s47, [#allocation8], 64, 64, 4
    $region9: #{tpu_custom_call.1} parent=1 // pred_fallthru
      _
    // Predicated region
    $region10: #{tpu_custom_call.1} parent=1 // pred_check
      _
    $region11: #{tpu_custom_call.1} parent=1 // pred_check_branch
      %54 = sbr.rel (0) target = $region13
    $region12: #{tpu_custom_call.1} parent=1 // pred_region
      %s56 = ssub.s32 3072, 3072
      %57 = vsyncadd [#allocation8], %s56
      %s58 = sshll.u32 [#allocation9], 4
      %s59 = int_to_ptr.vmem [resolvable:$true] %s58
      %64 = dma.hbm_to_vmem [thread:$0]  %s3, 3072, %s59, [#allocation8], 192, 192, 12
    $region13: #{tpu_custom_call.1} parent=1 // pred_fallthru
      _
    // Predicated region
    $region14: #{tpu_custom_call.1} parent=1 // pred_check
      _
    $region15: #{tpu_custom_call.1} parent=1 // pred_check_branch
      %66 = sbr.rel (0) target = $region17
    $region16: #{tpu_custom_call.1} parent=1 // pred_region
      %s68 = ssub.s32 1024, 1024
      %69 = vsyncadd [#allocation11], %s68
      %s70 = sshll.u32 [#allocation10], 4
      %s71 = int_to_ptr.vmem [resolvable:$true] %s70
      %76 = dma.hbm_to_vmem [thread:$0]  %s4, 1024, %s71, [#allocation11], 64, 64, 4
    $region17: #{tpu_custom_call.1} parent=1 // pred_fallthru
      _
    // Predicated region
    $region18: #{tpu_custom_call.1} parent=1 // pred_check
      _
    $region19: #{tpu_custom_call.1} parent=1 // pred_check_branch
      %78 = sbr.rel (0) target = $region21
    $region20: #{tpu_custom_call.1} parent=1 // pred_region
      %s80 = ssub.s32 2048, 2048
      %81 = vsyncadd [#allocation11], %s80
      %s82 = sshll.u32 [#allocation12], 4
      %s83 = int_to_ptr.vmem [resolvable:$true] %s82
      %88 = dma.hbm_to_vmem [thread:$0]  %s5, 2048, %s83, [#allocation11], 128, 128, 8
    $region21: #{tpu_custom_call.1} parent=1 // pred_fallthru
      _
    // Predicated region
    $region22: #{tpu_custom_call.1} parent=1 // pred_check
      _
    $region23: #{tpu_custom_call.1} parent=1 // pred_check_branch
      %90 = sbr.rel (0) target = $region25
    $region24: #{tpu_custom_call.1} parent=1 // pred_region
      %s92 = ssub.s32 1024, 1024
      %93 = vsyncadd [#allocation14], %s92
      %s94 = sshll.u32 [#allocation13], 4
      %s95 = int_to_ptr.vmem [resolvable:$true] %s94
      %100 = dma.hbm_to_vmem [thread:$0]  %s6, 1024, %s95, [#allocation14], 64, 64, 4
    $region25: #{tpu_custom_call.1} parent=1 // pred_fallthru
      _
    // Predicated region
    $region26: #{tpu_custom_call.1} parent=1 // pred_check
      _
    $region27: #{tpu_custom_call.1} parent=1 // pred_check_branch
      %102 = sbr.rel (0) target = $region29
    $region28: #{tpu_custom_call.1} parent=1 // pred_region
      %s104 = ssub.s32 1024, 1024
      %105 = vsyncadd [#allocation14], %s104
      %s106 = sshll.u32 [#allocation15], 4
      %s107 = int_to_ptr.vmem [resolvable:$true] %s106
      %112 = dma.hbm_to_vmem [thread:$0]  %s7, 1024, %s107, [#allocation14], 64, 64, 4
    $region29: #{tpu_custom_call.1} parent=1 // pred_fallthru
      _
    // Predicated region
    $region30: #{tpu_custom_call.1} parent=1 // pred_check
      _
    $region31: #{tpu_custom_call.1} parent=1 // pred_check_branch
      %114 = sbr.rel (0) target = $region33
    $region32: #{tpu_custom_call.1} parent=1 // pred_region
      %s116 = ssub.s32 2048, 2048
      %117 = vsyncadd [#allocation17], %s116
      %s118 = sshll.u32 [#allocation16], 4
      %s119 = int_to_ptr.vmem [resolvable:$true] %s118
      %124 = dma.hbm_to_vmem [thread:$0]  %s8, 2048, %s119, [#allocation17], 128, 128, 8
    $region33: #{tpu_custom_call.1} parent=1 // pred_fallthru
      _
    // Predicated region
    $region34: #{tpu_custom_call.1} parent=1 // pred_check
      _
    $region35: #{tpu_custom_call.1} parent=1 // pred_check_branch
      %126 = sbr.rel (0) target = $region37
    $region36: #{tpu_custom_call.1} parent=1 // pred_region
      %s128 = ssub.s32 2048, 2048
      %129 = vsyncadd [#allocation17], %s128
      %s130 = sshll.u32 [#allocation18], 4
      %s131 = int_to_ptr.vmem [resolvable:$true] %s130
      %136 = dma.hbm_to_vmem [thread:$0]  %s9, 2048, %s131, [#allocation17], 128, 128, 8
    $region37: #{tpu_custom_call.1} parent=1 // pred_fallthru
      _
    // Predicated region
    $region38: #{tpu_custom_call.1} parent=1 // pred_check
      _
    $region39: #{tpu_custom_call.1} parent=1 // pred_check_branch
      %138 = sbr.rel (0) target = $region41
    $region40: #{tpu_custom_call.1} parent=1 // pred_region
      _
    $region41: #{tpu_custom_call.1} parent=1 // pred_fallthru
      _
    // Predicated region
    $region42: #{tpu_custom_call.1} parent=1 // pred_check
      _
    $region43: #{tpu_custom_call.1} parent=1 // pred_check_branch
      %140 = sbr.rel (0) target = $region45
    $region44: #{tpu_custom_call.1} parent=1 // pred_region
      %141 = dma.done [#allocation5], 128
    $region45: #{tpu_custom_call.1} parent=1 // pred_fallthru
      _
    // Predicated region
    $region46: #{tpu_custom_call.1} parent=1 // pred_check
      _
    $region47: #{tpu_custom_call.1} parent=1 // pred_check_branch
      %143 = sbr.rel (0) target = $region49
    $region48: #{tpu_custom_call.1} parent=1 // pred_region
      %144 = dma.done [#allocation8], 128
    $region49: #{tpu_custom_call.1} parent=1 // pred_fallthru
      _
    // Predicated region
    $region50: #{tpu_custom_call.1} parent=1 // pred_check
      _
    $region51: #{tpu_custom_call.1} parent=1 // pred_check_branch
      %146 = sbr.rel (0) target = $region53
    $region52: #{tpu_custom_call.1} parent=1 // pred_region
      %147 = dma.done [#allocation8], 3072
    $region53: #{tpu_custom_call.1} parent=1 // pred_fallthru
      _
    // Predicated region
    $region54: #{tpu_custom_call.1} parent=1 // pred_check
      _
    $region55: #{tpu_custom_call.1} parent=1 // pred_check_branch
      %149 = sbr.rel (0) target = $region57
    $region56: #{tpu_custom_call.1} parent=1 // pred_region
      %150 = dma.done [#allocation11], 1024
    $region57: #{tpu_custom_call.1} parent=1 // pred_fallthru
      _
    // Predicated region
    $region58: #{tpu_custom_call.1} parent=1 // pred_check
      _
    $region59: #{tpu_custom_call.1} parent=1 // pred_check_branch
      %152 = sbr.rel (0) target = $region61
    $region60: #{tpu_custom_call.1} parent=1 // pred_region
      %153 = dma.done [#allocation11], 2048
    $region61: #{tpu_custom_call.1} parent=1 // pred_fallthru
      _
    // Predicated region
    $region62: #{tpu_custom_call.1} parent=1 // pred_check
      _
    $region63: #{tpu_custom_call.1} parent=1 // pred_check_branch
      %155 = sbr.rel (0) target = $region65
    $region64: #{tpu_custom_call.1} parent=1 // pred_region
      %156 = dma.done [#allocation14], 1024
    $region65: #{tpu_custom_call.1} parent=1 // pred_fallthru
      _
    // Predicated region
    $region66: #{tpu_custom_call.1} parent=1 // pred_check
      _
    $region67: #{tpu_custom_call.1} parent=1 // pred_check_branch
      %158 = sbr.rel (0) target = $region69
    $region68: #{tpu_custom_call.1} parent=1 // pred_region
      %159 = dma.done [#allocation14], 1024
    $region69: #{tpu_custom_call.1} parent=1 // pred_fallthru
      _
    // Predicated region
    $region70: #{tpu_custom_call.1} parent=1 // pred_check
      _
    $region71: #{tpu_custom_call.1} parent=1 // pred_check_branch
      %161 = sbr.rel (0) target = $region73
    $region72: #{tpu_custom_call.1} parent=1 // pred_region
      %162 = dma.done [#allocation17], 2048
    $region73: #{tpu_custom_call.1} parent=1 // pred_fallthru
      _
    // Predicated region
    $region74: #{tpu_custom_call.1} parent=1 // pred_check
      _
    $region75: #{tpu_custom_call.1} parent=1 // pred_check_branch
      %164 = sbr.rel (0) target = $region77
    $region76: #{tpu_custom_call.1} parent=1 // pred_region
      %165 = dma.done [#allocation17], 2048
    $region77: #{tpu_custom_call.1} parent=1 // pred_fallthru
      _
    %s167 = smul.u32 0, 2
    %v168 = vld [vmem:[#allocation4] sm:$0xf]
    %v169 = vld [vmem:[#allocation4 + $0x4] sm:$0xf]
    %v170 = vunpack.c.l.bf16 %v168
    %v171 = vunpack.c.l.bf16 %v169
    %v172 = vld [vmem:[#allocation7] sm:$0xf]
    %v173 = vld [vmem:[#allocation7 + $0x4] sm:$0xf]
    %v174 = vunpack.c.l.bf16 %v172
    %v175 = vunpack.c.l.bf16 %v173
    %v176 = vld [vmem:[%s10] sm:$0xff]
    %v177 = vld [vmem:[%s10 + $0x8] sm:$0x3f]
    %v178 = vld [vmem:[#allocation9] sm:$0xff]
    %v179 = vld [vmem:[#allocation9 + $0x8] sm:$0xf]
    %v180 = vld [vmem:[#allocation9 + $0xc] sm:$0xff]
    %v181 = vld [vmem:[#allocation9 + $0x14] sm:$0xf]
    %v182 = vld [vmem:[#allocation9 + $0x18] sm:$0xff]
    %v183 = vld [vmem:[#allocation9 + $0x20] sm:$0xf]
    %v184 = vld [vmem:[#allocation9 + $0x24] sm:$0xff]
    %v185 = vld [vmem:[#allocation9 + $0x2c] sm:$0xf]
    %v186 = vld [vmem:[#allocation9 + $0x30] sm:$0xff]
    %v187 = vld [vmem:[#allocation9 + $0x38] sm:$0xf]
    %v188 = vld [vmem:[#allocation9 + $0x3c] sm:$0xff]
    %v189 = vld [vmem:[#allocation9 + $0x44] sm:$0xf]
    %v190 = vld [vmem:[#allocation9 + $0x48] sm:$0xff]
    %v191 = vld [vmem:[#allocation9 + $0x50] sm:$0xf]
    %v192 = vld [vmem:[#allocation9 + $0x54] sm:$0xff]
    %v193 = vld [vmem:[#allocation9 + $0x5c] sm:$0xf]
    %v194 = vld [vmem:[#allocation9 + $0x60] sm:$0xff]
    %v195 = vld [vmem:[#allocation9 + $0x68] sm:$0xf]
    %v196 = vld [vmem:[#allocation9 + $0x6c] sm:$0xff]
    %v197 = vld [vmem:[#allocation9 + $0x74] sm:$0xf]
    %v198 = vld [vmem:[#allocation9 + $0x78] sm:$0xff]
    %v199 = vld [vmem:[#allocation9 + $0x80] sm:$0xf]
    %v200 = vld [vmem:[#allocation9 + $0x84] sm:$0xff]
    %v201 = vld [vmem:[#allocation9 + $0x8c] sm:$0xf]
    %v202 = vld [vmem:[#allocation9 + $0x90] sm:$0xff]
    %v203 = vld [vmem:[#allocation9 + $0x98] sm:$0xf]
    %v204 = vld [vmem:[#allocation9 + $0x9c] sm:$0xff]
    %v205 = vld [vmem:[#allocation9 + $0xa4] sm:$0xf]
    %v206 = vld [vmem:[#allocation9 + $0xa8] sm:$0xff]
    %v207 = vld [vmem:[#allocation9 + $0xb0] sm:$0xf]
    %v208 = vld [vmem:[#allocation9 + $0xb4] sm:$0xff]
    %v209 = vld [vmem:[#allocation9 + $0xbc] sm:$0xf]
    %v212 = vunpack.c.l.b16 %v168
    %v213 = vunpack.c.l.b16 %v169
    %v214 = vpack.c.b16 %v213, %v212
    %v248 = vunpack.c.l.b16 %v178
    %v249 = vunpack.c.h.b16 %v178
    %v250 = vunpack.c.l.b16 %v179
    %v251 = vunpack.c.l.b16 %v180
    %v252 = vunpack.c.h.b16 %v180
    %v253 = vunpack.c.l.b16 %v181
    %v254 = vunpack.c.l.b16 %v182
    %v255 = vunpack.c.h.b16 %v182
    %v256 = vunpack.c.l.b16 %v183
    %v257 = vunpack.c.l.b16 %v184
    %v258 = vunpack.c.h.b16 %v184
    %v259 = vunpack.c.l.b16 %v185
    %v260 = vunpack.c.l.b16 %v186
    %v261 = vunpack.c.h.b16 %v186
    %v262 = vunpack.c.l.b16 %v187
    %v263 = vunpack.c.l.b16 %v188
    %v264 = vunpack.c.h.b16 %v188
    %v265 = vunpack.c.l.b16 %v189
    %v266 = vunpack.c.l.b16 %v190
    %v267 = vunpack.c.h.b16 %v190
    %v268 = vunpack.c.l.b16 %v191
    %v269 = vunpack.c.l.b16 %v192
    %v270 = vunpack.c.h.b16 %v192
    %v271 = vunpack.c.l.b16 %v193
    %v272 = vunpack.c.l.b16 %v194
    %v273 = vunpack.c.h.b16 %v194
    %v274 = vunpack.c.l.b16 %v195
    %v275 = vunpack.c.l.b16 %v196
    %v276 = vunpack.c.h.b16 %v196
    %v277 = vunpack.c.l.b16 %v197
    %v278 = vunpack.c.l.b16 %v198
    %v279 = vunpack.c.h.b16 %v198
    %v280 = vunpack.c.l.b16 %v199
    %v281 = vunpack.c.l.b16 %v200
    %v282 = vunpack.c.h.b16 %v200
    %v283 = vunpack.c.l.b16 %v201
    %v284 = vunpack.c.l.b16 %v202
    %v285 = vunpack.c.h.b16 %v202
    %v286 = vunpack.c.l.b16 %v203
    %v287 = vunpack.c.l.b16 %v204
    %v288 = vunpack.c.h.b16 %v204
    %v289 = vunpack.c.l.b16 %v205
    %v290 = vunpack.c.l.b16 %v206
    %v291 = vunpack.c.h.b16 %v206
    %v292 = vunpack.c.l.b16 %v207
    %v293 = vunpack.c.l.b16 %v208
    %v294 = vunpack.c.h.b16 %v208
    %v295 = vunpack.c.l.b16 %v209
    %v296 = vpack.c.b16 %v251, %v248
    %v297 = vpack.c.b16 %v252, %v249
    %v298 = vpack.c.b16 %v253, %v250
    %v299 = vpack.c.b16 %v257, %v254
    %v300 = vpack.c.b16 %v258, %v255
    %v301 = vpack.c.b16 %v259, %v256
    %v302 = vpack.c.b16 %v263, %v260
    %v303 = vpack.c.b16 %v264, %v261
    %v304 = vpack.c.b16 %v265, %v262
    %v305 = vpack.c.b16 %v269, %v266
    %v306 = vpack.c.b16 %v270, %v267
    %v307 = vpack.c.b16 %v271, %v268
    %v308 = vpack.c.b16 %v275, %v272
    %v309 = vpack.c.b16 %v276, %v273
    %v310 = vpack.c.b16 %v277, %v274
    %v311 = vpack.c.b16 %v281, %v278
    %v312 = vpack.c.b16 %v282, %v279
    %v313 = vpack.c.b16 %v283, %v280
    %v314 = vpack.c.b16 %v287, %v284
    %v315 = vpack.c.b16 %v288, %v285
    %v316 = vpack.c.b16 %v289, %v286
    %v317 = vpack.c.b16 %v293, %v290
    %v318 = vpack.c.b16 %v294, %v291
    %v319 = vpack.c.b16 %v295, %v292
    %344 = vmatprep.subr.bf16.mxu0 %v297
    %345 = vmatpush1.bf16.msra.mxu0 %v296
    %346 = vmatprep.subr.bf16.mxu0 %v300
    %347 = vmatpush1.bf16.msra.mxu0 %v299
    %348 = vmatprep.subr.bf16.mxu0 %v303
    %349 = vmatpush1.bf16.msra.mxu0 %v302
    %350 = vmatprep.subr.bf16.mxu0 %v306
    %351 = vmatpush1.bf16.msra.mxu0 %v305
    %352 = vmatprep.subr.bf16.mxu0 %v309
    %353 = vmatpush1.bf16.msra.mxu0 %v308
    %354 = vmatprep.subr.bf16.mxu0 %v312
    %355 = vmatpush1.bf16.msra.mxu0 %v311
    %356 = vmatprep.subr.bf16.mxu0 %v315
    %357 = vmatpush1.bf16.msra.mxu0 %v314
    %358 = vmatprep.subr.bf16.mxu0 %v318
    %359 = vmatpush1.bf16.msra.mxu0 %v317
    %360 = vmatprep.subr.bf16.mxu0 0
    %361 = vmatpush1.bf16.msra.mxu0 0
    %362 = vmatprep.subr.bf16.mxu0 0
    %363 = vmatpush1.bf16.msra.mxu0 0
    %364 = vmatprep.subr.bf16.mxu0 0
    %365 = vmatpush1.bf16.msra.mxu0 0
    %366 = vmatprep.subr.bf16.mxu0 0
    %367 = vmatpush1.bf16.msra.mxu0 0
    %368 = vmatprep.subr.bf16.mxu0 0
    %369 = vmatpush1.bf16.msra.mxu0 0
    %370 = vmatprep.subr.bf16.mxu0 0
    %371 = vmatpush1.bf16.msra.mxu0 0
    %372 = vmatprep.subr.bf16.mxu0 0
    %373 = vmatpush1.bf16.msra.mxu0 0
    %374 = vmatprep.subr.bf16.mxu0 0
    %375 = vmatpush1.bf16.msra.mxu0 0
    %376 = vmatprep.mubr.bf16.mxu0 0
    %377 = vmatmul.mubr.bf16.gmra.mrb[0].mxu0 %v214
    %v378 = vpop.f32.mrb[0].mxu0
    %v379 = vadd.f32 0.0, %v378
    %v380 = vpop.f32.mrb[0].mxu0
    %v381 = vadd.f32 0.0, %v380
    %v382 = vpop.f32.mrb[0].mxu0
    %v383 = vadd.f32 0.0, %v382
    %v384 = vpop.f32.mrb[0].mxu0
    %v385 = vadd.f32 0.0, %v384
    %386 = vdwg.mxu0
    %387 = vmatprep.subr.bf16.mxu0 0
    %388 = vmatpush1.bf16.msra.mxu0 %v298
    %389 = vmatprep.subr.bf16.mxu0 0
    %390 = vmatpush1.bf16.msra.mxu0 %v301
    %391 = vmatprep.subr.bf16.mxu0 0
    %392 = vmatpush1.bf16.msra.mxu0 %v304
    %393 = vmatprep.subr.bf16.mxu0 0
    %394 = vmatpush1.bf16.msra.mxu0 %v307
    %395 = vmatprep.subr.bf16.mxu0 0
    %396 = vmatpush1.bf16.msra.mxu0 %v310
    %397 = vmatprep.subr.bf16.mxu0 0
    %398 = vmatpush1.bf16.msra.mxu0 %v313
    %399 = vmatprep.subr.bf16.mxu0 0
    %400 = vmatpush1.bf16.msra.mxu0 %v316
    %401 = vmatprep.subr.bf16.mxu0 0
    %402 = vmatpush1.bf16.msra.mxu0 %v319
    %403 = vmatprep.subr.bf16.mxu0 0
    %404 = vmatpush1.bf16.msra.mxu0 0
    %405 = vmatprep.subr.bf16.mxu0 0
    %406 = vmatpush1.bf16.msra.mxu0 0
    %407 = vmatprep.subr.bf16.mxu0 0
    %408 = vmatpush1.bf16.msra.mxu0 0
    %409 = vmatprep.subr.bf16.mxu0 0
    %410 = vmatpush1.bf16.msra.mxu0 0
    %411 = vmatprep.subr.bf16.mxu0 0
    %412 = vmatpush1.bf16.msra.mxu0 0
    %413 = vmatprep.subr.bf16.mxu0 0
    %414 = vmatpush1.bf16.msra.mxu0 0
    %415 = vmatprep.subr.bf16.mxu0 0
    %416 = vmatpush1.bf16.msra.mxu0 0
    %417 = vmatprep.subr.bf16.mxu0 0
    %418 = vmatpush1.bf16.msra.mxu0 0
    %419 = vmatprep.mubr.bf16.mxu0 0
    %420 = vmatmul.mubr.bf16.gmra.mrb[0].mxu0 %v214
    %v421 = vpop.f32.mrb[0].mxu0
    %v422 = vadd.f32 0.0, %v421
    %v423 = vpop.f32.mrb[0].mxu0
    %v424 = vpop.f32.mrb[0].mxu0
    %v425 = vadd.f32 0.0, %v424
    %v426 = vpop.f32.mrb[0].mxu0
    %427 = vdwg.mxu0
    %v428 = vpack.c.bf16 %v422, %v422
    %v429 = vpack.c.bf16 %v425, %v425
    %v430 = vpack.c.bf16 %v379, %v379
    %v431 = vpack.c.bf16 %v383, %v383
    %v432 = vpack.c.bf16 %v381, %v381
    %v433 = vpack.c.bf16 %v385, %v385
    %434 = vmatprep.subr.bf16.mxu0 0
    %435 = vmatpush1.bf16.xpose.msra.mxu0 %v432
    %436 = vmatprep.subr.bf16.mxu0 0
    %437 = vmatpush1.bf16.xpose.msra.mxu0 0
    %438 = vmatprep.subr.bf16.mxu0 0
    %439 = vmatpush1.bf16.xpose.msra.mxu0 0
    %440 = vmatprep.subr.bf16.mxu0 0
    %441 = vmatpush1.bf16.xpose.msra.mxu0 0
    %442 = vmatprep.subr.bf16.mxu0 0
    %443 = vmatpush1.bf16.xpose.msra.mxu0 0
    %444 = vmatprep.subr.bf16.mxu0 0
    %445 = vmatpush1.bf16.xpose.msra.mxu0 0
    %446 = vmatprep.subr.bf16.mxu0 0
    %447 = vmatpush1.bf16.xpose.msra.mxu0 0
    %448 = vmatprep.subr.bf16.mxu0 0
    %449 = vmatpush1.bf16.xpose.msra.mxu0 0
    %450 = vmatprep.subr.bf16.mxu0 0
    %451 = vmatpush1.bf16.xpose.msra.mxu0 0
    %452 = vmatprep.subr.bf16.mxu0 0
    %453 = vmatpush1.bf16.xpose.msra.mxu0 0
    %454 = vmatprep.subr.bf16.mxu0 0
    %455 = vmatpush1.bf16.xpose.msra.mxu0 0
    %456 = vmatprep.subr.bf16.mxu0 0
    %457 = vmatpush1.bf16.xpose.msra.mxu0 0
    %458 = vmatprep.subr.bf16.mxu0 0
    %459 = vmatpush1.bf16.xpose.msra.mxu0 0
    %460 = vmatprep.subr.bf16.mxu0 0
    %461 = vmatpush1.bf16.xpose.msra.mxu0 0
    %462 = vmatprep.subr.bf16.mxu0 0
    %463 = vmatpush1.bf16.xpose.msra.mxu0 0
    %464 = vmatprep.subr.bf16.mxu0 0
    %465 = vmatpush1.bf16.xpose.msra.mxu0 0
    %466 = vmatprep.mubr.bf16.mxu0 0
    %467 = vmatmul.mubr.bf16.gmra.mrb[0].mxu0 %v430
    %v468 = vpop.f32.mrb[0].mxu0
    %v469 = vadd.f32 0.0, %v468
    %v470 = vpop.f32.mrb[0].mxu0
    %v471 = vpop.f32.mrb[0].mxu0
    %v472 = vpop.f32.mrb[0].mxu0
    %473 = vdwg.mxu0
    %474 = vmatprep.subr.bf16.mxu0 0
    %475 = vmatpush1.bf16.xpose.msra.mxu0 %v433
    %476 = vmatprep.subr.bf16.mxu0 0
    %477 = vmatpush1.bf16.xpose.msra.mxu0 0
    %478 = vmatprep.subr.bf16.mxu0 0
    %479 = vmatpush1.bf16.xpose.msra.mxu0 0
    %480 = vmatprep.subr.bf16.mxu0 0
    %481 = vmatpush1.bf16.xpose.msra.mxu0 0
    %482 = vmatprep.subr.bf16.mxu0 0
    %483 = vmatpush1.bf16.xpose.msra.mxu0 0
    %484 = vmatprep.subr.bf16.mxu0 0
    %485 = vmatpush1.bf16.xpose.msra.mxu0 0
    %486 = vmatprep.subr.bf16.mxu0 0
    %487 = vmatpush1.bf16.xpose.msra.mxu0 0
    %488 = vmatprep.subr.bf16.mxu0 0
    %489 = vmatpush1.bf16.xpose.msra.mxu0 0
    %490 = vmatprep.subr.bf16.mxu0 0
    %491 = vmatpush1.bf16.xpose.msra.mxu0 0
    %492 = vmatprep.subr.bf16.mxu0 0
    %493 = vmatpush1.bf16.xpose.msra.mxu0 0
    %494 = vmatprep.subr.bf16.mxu0 0
    %495 = vmatpush1.bf16.xpose.msra.mxu0 0
    %496 = vmatprep.subr.bf16.mxu0 0
    %497 = vmatpush1.bf16.xpose.msra.mxu0 0
    %498 = vmatprep.subr.bf16.mxu0 0
    %499 = vmatpush1.bf16.xpose.msra.mxu0 0
    %500 = vmatprep.subr.bf16.mxu0 0
    %501 = vmatpush1.bf16.xpose.msra.mxu0 0
    %502 = vmatprep.subr.bf16.mxu0 0
    %503 = vmatpush1.bf16.xpose.msra.mxu0 0
    %504 = vmatprep.subr.bf16.mxu0 0
    %505 = vmatpush1.bf16.xpose.msra.mxu0 0
    %506 = vmatprep.mubr.bf16.mxu0 0
    %507 = vmatmul.mubr.bf16.gmra.mrb[0].mxu0 %v431
    %v508 = vpop.f32.mrb[0].mxu0
    %v509 = vadd.f32 0.0, %v508
    %v510 = vpop.f32.mrb[0].mxu0
    %v511 = vpop.f32.mrb[0].mxu0
    %v512 = vpop.f32.mrb[0].mxu0
    %513 = vdwg.mxu0
    %s514 = sld [smem:[#allocation3 + %s167]]
    %v515 = vstv %s514
    %s516 = sadd.s32 %s167, 1
    %s517 = sld [smem:[#allocation3 + %s516]]
    %v518 = vstv %s517
    %v519 = vlaneseq
    %v520 = vand.u32 %v519, 127
    %vm521 = vcmp.lt.s32.totalorder %v520, %v515
    %vm522 = vcmp.lt.s32.totalorder %v520, %v518
    %v523 = vsel %vm521, %v469, -1e+10
    %v524 = vsel %vm522, %v509, -1e+10
    %vm525 = vcmask 64512
    %v526 = vsel %vm525, %v523, -inf
    %527 = vmax.xlane.f32.xlu0 %v526
    %v528 = vpop.xlane.xlu0 %527
    %v529 = vsel %vm525, %v524, -inf
    %530 = vmax.xlane.f32.xlu0 %v529
    %v531 = vpop.xlane.xlu0 %530
    %v532 = vsub.f32 %v523, %v528
    %v533 = vsub.f32 %v524, %v531
    %v534 = vmul.f32 %v532, 1.442695
    %v535 = vpow.pop %v534
    %v536 = vmul.f32 %v533, 1.442695
    %v537 = vpow.pop %v536
    %v538 = vsel %vm525, %v535, 0.0
    %539 = vadd.xlane.f32.xlu0 %v538
    %v540 = vpop.xlane.xlu0 %539
    %v541 = vsel %vm525, %v537, 0.0
    %542 = vadd.xlane.f32.xlu0 %v541
    %v543 = vpop.xlane.xlu0 %542
    %v544 = vrcp.pop %v540
    %v545 = vmul.f32 %v535, %v544
    %v546 = vrcp.pop %v543
    %v547 = vmul.f32 %v537, %v546
    %548 = vst [vmem:[#allocation20] sm:$0xff] 0.0
    %549 = vst [vmem:[#allocation20 + $0x8] sm:$0xff] 0.0
    %550 = vst.msk [vmem:[#allocation20] sm:$0xff] %vm525, %v545
    %551 = vst.msk [vmem:[#allocation20 + $0x8] sm:$0xff] %vm525, %v547
    %v552 = vpack.c.bf16 %v545, %v545
    %v553 = vpack.c.bf16 %v547, %v547
    %v555 = vsel %vm525, %v552, 0
    %vm557 = vcmask 1043456
    %v559 = vsel %vm557, %v428, 0
    %561 = vmatprep.subr.bf16.mxu0 0
    %562 = vmatpush1.bf16.msra.mxu0 %v559
    %563 = vmatprep.subr.bf16.mxu0 0
    %564 = vmatpush1.bf16.msra.mxu0 0
    %565 = vmatprep.subr.bf16.mxu0 0
    %566 = vmatpush1.bf16.msra.mxu0 0
    %567 = vmatprep.subr.bf16.mxu0 0
    %568 = vmatpush1.bf16.msra.mxu0 0
    %569 = vmatprep.subr.bf16.mxu0 0
    %570 = vmatpush1.bf16.msra.mxu0 0
    %571 = vmatprep.subr.bf16.mxu0 0
    %572 = vmatpush1.bf16.msra.mxu0 0
    %573 = vmatprep.subr.bf16.mxu0 0
    %574 = vmatpush1.bf16.msra.mxu0 0
    %575 = vmatprep.subr.bf16.mxu0 0
    %576 = vmatpush1.bf16.msra.mxu0 0
    %577 = vmatprep.subr.bf16.mxu0 0
    %578 = vmatpush1.bf16.msra.mxu0 0
    %579 = vmatprep.subr.bf16.mxu0 0
    %580 = vmatpush1.bf16.msra.mxu0 0
    %581 = vmatprep.subr.bf16.mxu0 0
    %582 = vmatpush1.bf16.msra.mxu0 0
    %583 = vmatprep.subr.bf16.mxu0 0
    %584 = vmatpush1.bf16.msra.mxu0 0
    %585 = vmatprep.subr.bf16.mxu0 0
    %586 = vmatpush1.bf16.msra.mxu0 0
    %587 = vmatprep.subr.bf16.mxu0 0
    %588 = vmatpush1.bf16.msra.mxu0 0
    %589 = vmatprep.subr.bf16.mxu0 0
    %590 = vmatpush1.bf16.msra.mxu0 0
    %591 = vmatprep.subr.bf16.mxu0 0
    %592 = vmatpush1.bf16.msra.mxu0 0
    %593 = vmatprep.mubr.bf16.mxu0 0
    %594 = vmatmul.mubr.bf16.gmra.mrb[0].mxu0 %v555
    %v595 = vpop.f32.mrb[0].mxu0
    %v596 = vadd.f32 0.0, %v595
    %v597 = vpop.f32.mrb[0].mxu0
    %v598 = vpop.f32.mrb[0].mxu0
    %v599 = vpop.f32.mrb[0].mxu0
    %600 = vdwg.mxu0
    %v602 = vsel %vm525, %v553, 0
    %v605 = vsel %vm557, %v429, 0
    %607 = vmatprep.subr.bf16.mxu0 0
    %608 = vmatpush1.bf16.msra.mxu0 %v605
    %609 = vmatprep.subr.bf16.mxu0 0
    %610 = vmatpush1.bf16.msra.mxu0 0
    %611 = vmatprep.subr.bf16.mxu0 0
    %612 = vmatpush1.bf16.msra.mxu0 0
    %613 = vmatprep.subr.bf16.mxu0 0
    %614 = vmatpush1.bf16.msra.mxu0 0
    %615 = vmatprep.subr.bf16.mxu0 0
    %616 = vmatpush1.bf16.msra.mxu0 0
    %617 = vmatprep.subr.bf16.mxu0 0
    %618 = vmatpush1.bf16.msra.mxu0 0
    %619 = vmatprep.subr.bf16.mxu0 0
    %620 = vmatpush1.bf16.msra.mxu0 0
    %621 = vmatprep.subr.bf16.mxu0 0
    %622 = vmatpush1.bf16.msra.mxu0 0
    %623 = vmatprep.subr.bf16.mxu0 0
    %624 = vmatpush1.bf16.msra.mxu0 0
    %625 = vmatprep.subr.bf16.mxu0 0
    %626 = vmatpush1.bf16.msra.mxu0 0
    %627 = vmatprep.subr.bf16.mxu0 0
    %628 = vmatpush1.bf16.msra.mxu0 0
    %629 = vmatprep.subr.bf16.mxu0 0
    %630 = vmatpush1.bf16.msra.mxu0 0
    %631 = vmatprep.subr.bf16.mxu0 0
    %632 = vmatpush1.bf16.msra.mxu0 0
    %633 = vmatprep.subr.bf16.mxu0 0
    %634 = vmatpush1.bf16.msra.mxu0 0
    %635 = vmatprep.subr.bf16.mxu0 0
    %636 = vmatpush1.bf16.msra.mxu0 0
    %637 = vmatprep.subr.bf16.mxu0 0
    %638 = vmatpush1.bf16.msra.mxu0 0
    %639 = vmatprep.mubr.bf16.mxu0 0
    %640 = vmatmul.mubr.bf16.gmra.mrb[0].mxu0 %v602
    %v641 = vpop.f32.mrb[0].mxu0
    %v642 = vadd.f32 0.0, %v641
    %v643 = vpop.f32.mrb[0].mxu0
    %v644 = vpop.f32.mrb[0].mxu0
    %v645 = vpop.f32.mrb[0].mxu0
    %646 = vdwg.mxu0
    %v647 = vcvt.s32.f32 %v515
    %v648 = vcvt.s32.f32 %v518
    %v649 = vrsqrt.pop %v647
    %v650 = vmul.f32 %v647, %v649
    %vm651 = vcmp.eq.f32.partialorder %v647, inf
    %v652 = vsel %vm651, %v647, %v650
    %vm653 = vcmp.eq.f32.partialorder %v647, 0.0
    %v654 = vand.u32 %v647, 2147483648
    %v655 = vsel %vm653, %v654, %v652
    %v656 = vrsqrt.pop %v648
    %v657 = vmul.f32 %v648, %v656
    %vm658 = vcmp.eq.f32.partialorder %v648, inf
    %v659 = vsel %vm658, %v648, %v657
    %vm660 = vcmp.eq.f32.partialorder %v648, 0.0
    %v661 = vand.u32 %v648, 2147483648
    %v662 = vsel %vm660, %v661, %v659
    %v663 = vmul.f32 %v596, %v655
    %v664 = vmul.f32 %v642, %v662
    %v665 = vpack.c.bf16 %v664, %v663
    %v666 = vld [vmem:[#allocation10] sm:$0xf]
    %v667 = vld [vmem:[#allocation10 + $0x4] sm:$0xf]
    %v668 = vld [vmem:[#allocation10 + $0x8] sm:$0xf]
    %v669 = vld [vmem:[#allocation10 + $0xc] sm:$0xf]
    %v670 = vld [vmem:[#allocation10 + $0x10] sm:$0xf]
    %v671 = vld [vmem:[#allocation10 + $0x14] sm:$0xf]
    %v672 = vld [vmem:[#allocation10 + $0x18] sm:$0xf]
    %v673 = vld [vmem:[#allocation10 + $0x1c] sm:$0xf]
    %v674 = vld [vmem:[#allocation10 + $0x20] sm:$0xf]
    %v675 = vld [vmem:[#allocation10 + $0x24] sm:$0xf]
    %v676 = vld [vmem:[#allocation10 + $0x28] sm:$0xf]
    %v677 = vld [vmem:[#allocation10 + $0x2c] sm:$0xf]
    %v678 = vld [vmem:[#allocation10 + $0x30] sm:$0xf]
    %v679 = vld [vmem:[#allocation10 + $0x34] sm:$0xf]
    %v680 = vld [vmem:[#allocation10 + $0x38] sm:$0xf]
    %v681 = vld [vmem:[#allocation10 + $0x3c] sm:$0xf]
    %v698 = vunpack.c.l.b16 %v666
    %v699 = vunpack.c.l.b16 %v667
    %v700 = vunpack.c.l.b16 %v668
    %v701 = vunpack.c.l.b16 %v669
    %v702 = vunpack.c.l.b16 %v670
    %v703 = vunpack.c.l.b16 %v671
    %v704 = vunpack.c.l.b16 %v672
    %v705 = vunpack.c.l.b16 %v673
    %v706 = vunpack.c.l.b16 %v674
    %v707 = vunpack.c.l.b16 %v675
    %v708 = vunpack.c.l.b16 %v676
    %v709 = vunpack.c.l.b16 %v677
    %v710 = vunpack.c.l.b16 %v678
    %v711 = vunpack.c.l.b16 %v679
    %v712 = vunpack.c.l.b16 %v680
    %v713 = vunpack.c.l.b16 %v681
    %v714 = vpack.c.b16 %v699, %v698
    %v715 = vpack.c.b16 %v701, %v700
    %v716 = vpack.c.b16 %v703, %v702
    %v717 = vpack.c.b16 %v705, %v704
    %v718 = vpack.c.b16 %v707, %v706
    %v719 = vpack.c.b16 %v709, %v708
    %v720 = vpack.c.b16 %v711, %v710
    %v721 = vpack.c.b16 %v713, %v712
    %730 = vmatprep.subr.bf16.mxu0 0
    %731 = vmatpush1.bf16.msra.mxu0 %v714
    %732 = vmatprep.subr.bf16.mxu0 0
    %733 = vmatpush1.bf16.msra.mxu0 %v715
    %734 = vmatprep.subr.bf16.mxu0 0
    %735 = vmatpush1.bf16.msra.mxu0 %v716
    %736 = vmatprep.subr.bf16.mxu0 0
    %737 = vmatpush1.bf16.msra.mxu0 %v717
    %738 = vmatprep.subr.bf16.mxu0 0
    %739 = vmatpush1.bf16.msra.mxu0 %v718
    %740 = vmatprep.subr.bf16.mxu0 0
    %741 = vmatpush1.bf16.msra.mxu0 %v719
    %742 = vmatprep.subr.bf16.mxu0 0
    %743 = vmatpush1.bf16.msra.mxu0 %v720
    %744 = vmatprep.subr.bf16.mxu0 0
    %745 = vmatpush1.bf16.msra.mxu0 %v721
    %746 = vmatprep.subr.bf16.mxu0 0
    %747 = vmatpush1.bf16.msra.mxu0 0
    %748 = vmatprep.subr.bf16.mxu0 0
    %749 = vmatpush1.bf16.msra.mxu0 0
    %750 = vmatprep.subr.bf16.mxu0 0
    %751 = vmatpush1.bf16.msra.mxu0 0
    %752 = vmatprep.subr.bf16.mxu0 0
    %753 = vmatpush1.bf16.msra.mxu0 0
    %754 = vmatprep.subr.bf16.mxu0 0
    %755 = vmatpush1.bf16.msra.mxu0 0
    %756 = vmatprep.subr.bf16.mxu0 0
    %757 = vmatpush1.bf16.msra.mxu0 0
    %758 = vmatprep.subr.bf16.mxu0 0
    %759 = vmatpush1.bf16.msra.mxu0 0
    %760 = vmatprep.subr.bf16.mxu0 0
    %761 = vmatpush1.bf16.msra.mxu0 0
    %762 = vmatprep.mubr.bf16.mxu0 0
    %763 = vmatmul.mubr.bf16.gmra.mrb[0].mxu0 %v665
    %v764 = vpop.f32.mrb[0].mxu0
    %v765 = vadd.f32 0.0, %v764
    %v766 = vpop.f32.mrb[0].mxu0
    %v767 = vpop.f32.mrb[0].mxu0
    %v768 = vadd.f32 0.0, %v767
    %v769 = vpop.f32.mrb[0].mxu0
    %770 = vdwg.mxu0
    %v771 = vpack.c.bf16 %v768, %v765
    %v772 = vld [vmem:[#allocation12] sm:$0xff]
    %v773 = vld [vmem:[#allocation12 + $0x8] sm:$0xff]
    %v774 = vld [vmem:[#allocation12 + $0x10] sm:$0xff]
    %v775 = vld [vmem:[#allocation12 + $0x18] sm:$0xff]
    %v776 = vld [vmem:[#allocation12 + $0x20] sm:$0xff]
    %v777 = vld [vmem:[#allocation12 + $0x28] sm:$0xff]
    %v778 = vld [vmem:[#allocation12 + $0x30] sm:$0xff]
    %v779 = vld [vmem:[#allocation12 + $0x38] sm:$0xff]
    %v780 = vld [vmem:[#allocation12 + $0x40] sm:$0xff]
    %v781 = vld [vmem:[#allocation12 + $0x48] sm:$0xff]
    %v782 = vld [vmem:[#allocation12 + $0x50] sm:$0xff]
    %v783 = vld [vmem:[#allocation12 + $0x58] sm:$0xff]
    %v784 = vld [vmem:[#allocation12 + $0x60] sm:$0xff]
    %v785 = vld [vmem:[#allocation12 + $0x68] sm:$0xff]
    %v786 = vld [vmem:[#allocation12 + $0x70] sm:$0xff]
    %v787 = vld [vmem:[#allocation12 + $0x78] sm:$0xff]
    %v804 = vunpack.c.l.b16 %v772
    %v805 = vunpack.c.h.b16 %v772
    %v806 = vunpack.c.l.b16 %v773
    %v807 = vunpack.c.h.b16 %v773
    %v808 = vunpack.c.l.b16 %v774
    %v809 = vunpack.c.h.b16 %v774
    %v810 = vunpack.c.l.b16 %v775
    %v811 = vunpack.c.h.b16 %v775
    %v812 = vunpack.c.l.b16 %v776
    %v813 = vunpack.c.h.b16 %v776
    %v814 = vunpack.c.l.b16 %v777
    %v815 = vunpack.c.h.b16 %v777
    %v816 = vunpack.c.l.b16 %v778
    %v817 = vunpack.c.h.b16 %v778
    %v818 = vunpack.c.l.b16 %v779
    %v819 = vunpack.c.h.b16 %v779
    %v820 = vunpack.c.l.b16 %v780
    %v821 = vunpack.c.h.b16 %v780
    %v822 = vunpack.c.l.b16 %v781
    %v823 = vunpack.c.h.b16 %v781
    %v824 = vunpack.c.l.b16 %v782
    %v825 = vunpack.c.h.b16 %v782
    %v826 = vunpack.c.l.b16 %v783
    %v827 = vunpack.c.h.b16 %v783
    %v828 = vunpack.c.l.b16 %v784
    %v829 = vunpack.c.h.b16 %v784
    %v830 = vunpack.c.l.b16 %v785
    %v831 = vunpack.c.h.b16 %v785
    %v832 = vunpack.c.l.b16 %v786
    %v833 = vunpack.c.h.b16 %v786
    %v834 = vunpack.c.l.b16 %v787
    %v835 = vunpack.c.h.b16 %v787
    %v836 = vpack.c.b16 %v806, %v804
    %v837 = vpack.c.b16 %v807, %v805
    %v838 = vpack.c.b16 %v810, %v808
    %v839 = vpack.c.b16 %v811, %v809
    %v840 = vpack.c.b16 %v814, %v812
    %v841 = vpack.c.b16 %v815, %v813
    %v842 = vpack.c.b16 %v818, %v816
    %v843 = vpack.c.b16 %v819, %v817
    %v844 = vpack.c.b16 %v822, %v820
    %v845 = vpack.c.b16 %v823, %v821
    %v846 = vpack.c.b16 %v826, %v824
    %v847 = vpack.c.b16 %v827, %v825
    %v848 = vpack.c.b16 %v830, %v828
    %v849 = vpack.c.b16 %v831, %v829
    %v850 = vpack.c.b16 %v834, %v832
    %v851 = vpack.c.b16 %v835, %v833
    %868 = vmatprep.subr.bf16.mxu0 %v837
    %869 = vmatpush1.bf16.msra.mxu0 %v836
    %870 = vmatprep.subr.bf16.mxu0 %v839
    %871 = vmatpush1.bf16.msra.mxu0 %v838
    %872 = vmatprep.subr.bf16.mxu0 %v841
    %873 = vmatpush1.bf16.msra.mxu0 %v840
    %874 = vmatprep.subr.bf16.mxu0 %v843
    %875 = vmatpush1.bf16.msra.mxu0 %v842
    %876 = vmatprep.subr.bf16.mxu0 %v845
    %877 = vmatpush1.bf16.msra.mxu0 %v844
    %878 = vmatprep.subr.bf16.mxu0 %v847
    %879 = vmatpush1.bf16.msra.mxu0 %v846
    %880 = vmatprep.subr.bf16.mxu0 %v849
    %881 = vmatpush1.bf16.msra.mxu0 %v848
    %882 = vmatprep.subr.bf16.mxu0 %v851
    %883 = vmatpush1.bf16.msra.mxu0 %v850
    %884 = vmatprep.subr.bf16.mxu0 0
    %885 = vmatpush1.bf16.msra.mxu0 0
    %886 = vmatprep.subr.bf16.mxu0 0
    %887 = vmatpush1.bf16.msra.mxu0 0
    %888 = vmatprep.subr.bf16.mxu0 0
    %889 = vmatpush1.bf16.msra.mxu0 0
    %890 = vmatprep.subr.bf16.mxu0 0
    %891 = vmatpush1.bf16.msra.mxu0 0
    %892 = vmatprep.subr.bf16.mxu0 0
    %893 = vmatpush1.bf16.msra.mxu0 0
    %894 = vmatprep.subr.bf16.mxu0 0
    %895 = vmatpush1.bf16.msra.mxu0 0
    %896 = vmatprep.subr.bf16.mxu0 0
    %897 = vmatpush1.bf16.msra.mxu0 0
    %898 = vmatprep.subr.bf16.mxu0 0
    %899 = vmatpush1.bf16.msra.mxu0 0
    %900 = vmatprep.mubr.bf16.mxu0 0
    %901 = vmatmul.mubr.bf16.gmra.mrb[0].mxu0 %v771
    %v902 = vpop.f32.mrb[0].mxu0
    %v903 = vadd.f32 0.0, %v902
    %v904 = vpop.f32.mrb[0].mxu0
    %v905 = vadd.f32 0.0, %v904
    %v906 = vpop.f32.mrb[0].mxu0
    %v907 = vadd.f32 0.0, %v906
    %v908 = vpop.f32.mrb[0].mxu0
    %v909 = vadd.f32 0.0, %v908
    %910 = vdwg.mxu0
    %v911 = vlaneseq
    %v912 = vshrl.u32 %v911, 7
    %v913 = vsub.s32 0, %v912
    %v914 = vrot.slane %v176, %v913
    %v915 = vadd.f32 %v903, %v914
    %v916 = vadd.f32 %v907, %v914
    %v917 = vlaneseq
    %v918 = vshrl.u32 %v917, 7
    %v919 = vsub.s32 1, %v918
    %v920 = vrot.slane %v176, %v919
    %v921 = vadd.f32 %v905, %v920
    %v922 = vadd.f32 %v909, %v920
    %v923 = vxor.u32 %v921, 2147483648
    %v924 = vxor.u32 %v922, 2147483648
    %v925 = vmul.f32 %v923, 1.442695
    %v926 = vpow.pop %v925
    %v927 = vmul.f32 %v924, 1.442695
    %v928 = vpow.pop %v927
    %v929 = vadd.f32 %v926, 1.0
    %v930 = vadd.f32 %v928, 1.0
    %v931 = vrcp.pop %v929
    %v932 = vmul.f32 1.0, %v931
    %v933 = vrcp.pop %v930
    %v934 = vmul.f32 1.0, %v933
    %v935 = vmul.f32 %v915, %v932
    %v936 = vmul.f32 %v916, %v934
    %v937 = vadd.f32 %v935, %v170
    %v938 = vadd.f32 %v936, %v171
    %939 = vadd.xlane.f32.xlu0 %v937
    %v940 = vpop.xlane.xlu0 %939
    %941 = vadd.xlane.f32.xlu0 %v938
    %v942 = vpop.xlane.xlu0 %941
    %v943 = vrcp.pop 128.0
    %v944 = vmul.f32 %v940, %v943
    %v945 = vmul.f32 %v942, %v943
    %v946 = vsub.f32 %v937, %v944
    %v947 = vsub.f32 %v938, %v945
    %v948 = vmul.f32 %v946, %v946
    %v949 = vmul.f32 %v947, %v947
    %950 = vadd.xlane.f32.xlu0 %v948
    %v951 = vpop.xlane.xlu0 %950
    %952 = vadd.xlane.f32.xlu0 %v949
    %v953 = vpop.xlane.xlu0 %952
    %v954 = vmul.f32 %v951, %v943
    %v955 = vmul.f32 %v953, %v943
    %v956 = vadd.f32 %v954, 1e-05
    %v957 = vadd.f32 %v955, 1e-05
    %v958 = vrsqrt.pop %v956
    %v959 = vrsqrt.pop %v957
    %v960 = vmul.f32 %v946, %v958
    %v961 = vmul.f32 %v947, %v959
    %v962 = vlaneseq
    %v963 = vshrl.u32 %v962, 7
    %v964 = vsub.s32 2, %v963
    %v965 = vrot.slane %v176, %v964
    %v966 = vmul.f32 %v960, %v965
    %v967 = vmul.f32 %v961, %v965
    %v968 = vlaneseq
    %v969 = vshrl.u32 %v968, 7
    %v970 = vsub.s32 3, %v969
    %v971 = vrot.slane %v176, %v970
    %v972 = vadd.f32 %v966, %v971
    %v973 = vadd.f32 %v967, %v971
    %v974 = vpack.c.bf16 %v973, %v972
    %v975 = vld [vmem:[#allocation13] sm:$0xf]
    %v976 = vld [vmem:[#allocation13 + $0x4] sm:$0xf]
    %v977 = vld [vmem:[#allocation13 + $0x8] sm:$0xf]
    %v978 = vld [vmem:[#allocation13 + $0xc] sm:$0xf]
    %v979 = vld [vmem:[#allocation13 + $0x10] sm:$0xf]
    %v980 = vld [vmem:[#allocation13 + $0x14] sm:$0xf]
    %v981 = vld [vmem:[#allocation13 + $0x18] sm:$0xf]
    %v982 = vld [vmem:[#allocation13 + $0x1c] sm:$0xf]
    %v983 = vld [vmem:[#allocation13 + $0x20] sm:$0xf]
    %v984 = vld [vmem:[#allocation13 + $0x24] sm:$0xf]
    %v985 = vld [vmem:[#allocation13 + $0x28] sm:$0xf]
    %v986 = vld [vmem:[#allocation13 + $0x2c] sm:$0xf]
    %v987 = vld [vmem:[#allocation13 + $0x30] sm:$0xf]
    %v988 = vld [vmem:[#allocation13 + $0x34] sm:$0xf]
    %v989 = vld [vmem:[#allocation13 + $0x38] sm:$0xf]
    %v990 = vld [vmem:[#allocation13 + $0x3c] sm:$0xf]
    %v991 = vlaneseq
    %v992 = vshrl.u32 %v991, 7
    %v993 = vsub.s32 4, %v992
    %v994 = vrot.slane %v176, %v993
    %v1011 = vunpack.c.l.b16 %v975
    %v1012 = vunpack.c.l.b16 %v976
    %v1013 = vunpack.c.l.b16 %v977
    %v1014 = vunpack.c.l.b16 %v978
    %v1015 = vunpack.c.l.b16 %v979
    %v1016 = vunpack.c.l.b16 %v980
    %v1017 = vunpack.c.l.b16 %v981
    %v1018 = vunpack.c.l.b16 %v982
    %v1019 = vunpack.c.l.b16 %v983
    %v1020 = vunpack.c.l.b16 %v984
    %v1021 = vunpack.c.l.b16 %v985
    %v1022 = vunpack.c.l.b16 %v986
    %v1023 = vunpack.c.l.b16 %v987
    %v1024 = vunpack.c.l.b16 %v988
    %v1025 = vunpack.c.l.b16 %v989
    %v1026 = vunpack.c.l.b16 %v990
    %v1027 = vpack.c.b16 %v1012, %v1011
    %v1028 = vpack.c.b16 %v1014, %v1013
    %v1029 = vpack.c.b16 %v1016, %v1015
    %v1030 = vpack.c.b16 %v1018, %v1017
    %v1031 = vpack.c.b16 %v1020, %v1019
    %v1032 = vpack.c.b16 %v1022, %v1021
    %v1033 = vpack.c.b16 %v1024, %v1023
    %v1034 = vpack.c.b16 %v1026, %v1025
    %1043 = vmatprep.subr.bf16.mxu0 0
    %1044 = vmatpush1.bf16.msra.mxu0 %v1027
    %1045 = vmatprep.subr.bf16.mxu0 0
    %1046 = vmatpush1.bf16.msra.mxu0 %v1028
    %1047 = vmatprep.subr.bf16.mxu0 0
    %1048 = vmatpush1.bf16.msra.mxu0 %v1029
    %1049 = vmatprep.subr.bf16.mxu0 0
    %1050 = vmatpush1.bf16.msra.mxu0 %v1030
    %1051 = vmatprep.subr.bf16.mxu0 0
    %1052 = vmatpush1.bf16.msra.mxu0 %v1031
    %1053 = vmatprep.subr.bf16.mxu0 0
    %1054 = vmatpush1.bf16.msra.mxu0 %v1032
    %1055 = vmatprep.subr.bf16.mxu0 0
    %1056 = vmatpush1.bf16.msra.mxu0 %v1033
    %1057 = vmatprep.subr.bf16.mxu0 0
    %1058 = vmatpush1.bf16.msra.mxu0 %v1034
    %1059 = vmatprep.subr.bf16.mxu0 0
    %1060 = vmatpush1.bf16.msra.mxu0 0
    %1061 = vmatprep.subr.bf16.mxu0 0
    %1062 = vmatpush1.bf16.msra.mxu0 0
    %1063 = vmatprep.subr.bf16.mxu0 0
    %1064 = vmatpush1.bf16.msra.mxu0 0
    %1065 = vmatprep.subr.bf16.mxu0 0
    %1066 = vmatpush1.bf16.msra.mxu0 0
    %1067 = vmatprep.subr.bf16.mxu0 0
    %1068 = vmatpush1.bf16.msra.mxu0 0
    %1069 = vmatprep.subr.bf16.mxu0 0
    %1070 = vmatpush1.bf16.msra.mxu0 0
    %1071 = vmatprep.subr.bf16.mxu0 0
    %1072 = vmatpush1.bf16.msra.mxu0 0
    %1073 = vmatprep.subr.bf16.mxu0 0
    %1074 = vmatpush1.bf16.msra.mxu0 0
    %1075 = vmatprep.mubr.bf16.mxu0 0
    %1076 = vmatmul.mubr.bf16.gmra.mrb[0].mxu0 %v974
    %v1077 = vpop.f32.mrb[0].mxu0
    %v1078 = vadd.f32 %v994, %v1077
    %v1079 = vpop.f32.mrb[0].mxu0
    %v1080 = vpop.f32.mrb[0].mxu0
    %v1081 = vadd.f32 %v994, %v1080
    %v1082 = vpop.f32.mrb[0].mxu0
    %1083 = vdwg.mxu0
    %vm1084 = vcmp.gt.f32.partialorder %v1078, 0.0
    %vm1085 = vcmp.gt.f32.partialorder %v1081, 0.0
    %v1086 = vmin.f32 %v1078, 0.0
    %v1087 = vmin.f32 %v1081, 0.0
    %v1088 = vmul.f32 %v1086, 1.442695
    %v1089 = vpow.pop %v1088
    %v1090 = vmul.f32 %v1087, 1.442695
    %v1091 = vpow.pop %v1090
    %v1092 = vsub.f32 %v1089, 1.0
    %v1093 = vsub.f32 %v1091, 1.0
    %v1094 = vsel %vm1084, %v1078, %v1092
    %v1095 = vsel %vm1085, %v1081, %v1093
    %v1096 = vpack.c.bf16 %v1095, %v1094
    %v1097 = vld [vmem:[#allocation15] sm:$0xf]
    %v1098 = vld [vmem:[#allocation15 + $0x4] sm:$0xf]
    %v1099 = vld [vmem:[#allocation15 + $0x8] sm:$0xf]
    %v1100 = vld [vmem:[#allocation15 + $0xc] sm:$0xf]
    %v1101 = vld [vmem:[#allocation15 + $0x10] sm:$0xf]
    %v1102 = vld [vmem:[#allocation15 + $0x14] sm:$0xf]
    %v1103 = vld [vmem:[#allocation15 + $0x18] sm:$0xf]
    %v1104 = vld [vmem:[#allocation15 + $0x1c] sm:$0xf]
    %v1105 = vld [vmem:[#allocation15 + $0x20] sm:$0xf]
    %v1106 = vld [vmem:[#allocation15 + $0x24] sm:$0xf]
    %v1107 = vld [vmem:[#allocation15 + $0x28] sm:$0xf]
    %v1108 = vld [vmem:[#allocation15 + $0x2c] sm:$0xf]
    %v1109 = vld [vmem:[#allocation15 + $0x30] sm:$0xf]
    %v1110 = vld [vmem:[#allocation15 + $0x34] sm:$0xf]
    %v1111 = vld [vmem:[#allocation15 + $0x38] sm:$0xf]
    %v1112 = vld [vmem:[#allocation15 + $0x3c] sm:$0xf]
    %v1113 = vlaneseq
    %v1114 = vshrl.u32 %v1113, 7
    %v1115 = vsub.s32 5, %v1114
    %v1116 = vrot.slane %v176, %v1115
    %v1133 = vunpack.c.l.b16 %v1097
    %v1134 = vunpack.c.l.b16 %v1098
    %v1135 = vunpack.c.l.b16 %v1099
    %v1136 = vunpack.c.l.b16 %v1100
    %v1137 = vunpack.c.l.b16 %v1101
    %v1138 = vunpack.c.l.b16 %v1102
    %v1139 = vunpack.c.l.b16 %v1103
    %v1140 = vunpack.c.l.b16 %v1104
    %v1141 = vunpack.c.l.b16 %v1105
    %v1142 = vunpack.c.l.b16 %v1106
    %v1143 = vunpack.c.l.b16 %v1107
    %v1144 = vunpack.c.l.b16 %v1108
    %v1145 = vunpack.c.l.b16 %v1109
    %v1146 = vunpack.c.l.b16 %v1110
    %v1147 = vunpack.c.l.b16 %v1111
    %v1148 = vunpack.c.l.b16 %v1112
    %v1149 = vpack.c.b16 %v1134, %v1133
    %v1150 = vpack.c.b16 %v1136, %v1135
    %v1151 = vpack.c.b16 %v1138, %v1137
    %v1152 = vpack.c.b16 %v1140, %v1139
    %v1153 = vpack.c.b16 %v1142, %v1141
    %v1154 = vpack.c.b16 %v1144, %v1143
    %v1155 = vpack.c.b16 %v1146, %v1145
    %v1156 = vpack.c.b16 %v1148, %v1147
    %1165 = vmatprep.subr.bf16.mxu0 0
    %1166 = vmatpush1.bf16.msra.mxu0 %v1149
    %1167 = vmatprep.subr.bf16.mxu0 0
    %1168 = vmatpush1.bf16.msra.mxu0 %v1150
    %1169 = vmatprep.subr.bf16.mxu0 0
    %1170 = vmatpush1.bf16.msra.mxu0 %v1151
    %1171 = vmatprep.subr.bf16.mxu0 0
    %1172 = vmatpush1.bf16.msra.mxu0 %v1152
    %1173 = vmatprep.subr.bf16.mxu0 0
    %1174 = vmatpush1.bf16.msra.mxu0 %v1153
    %1175 = vmatprep.subr.bf16.mxu0 0
    %1176 = vmatpush1.bf16.msra.mxu0 %v1154
    %1177 = vmatprep.subr.bf16.mxu0 0
    %1178 = vmatpush1.bf16.msra.mxu0 %v1155
    %1179 = vmatprep.subr.bf16.mxu0 0
    %1180 = vmatpush1.bf16.msra.mxu0 %v1156
    %1181 = vmatprep.subr.bf16.mxu0 0
    %1182 = vmatpush1.bf16.msra.mxu0 0
    %1183 = vmatprep.subr.bf16.mxu0 0
    %1184 = vmatpush1.bf16.msra.mxu0 0
    %1185 = vmatprep.subr.bf16.mxu0 0
    %1186 = vmatpush1.bf16.msra.mxu0 0
    %1187 = vmatprep.subr.bf16.mxu0 0
    %1188 = vmatpush1.bf16.msra.mxu0 0
    %1189 = vmatprep.subr.bf16.mxu0 0
    %1190 = vmatpush1.bf16.msra.mxu0 0
    %1191 = vmatprep.subr.bf16.mxu0 0
    %1192 = vmatpush1.bf16.msra.mxu0 0
    %1193 = vmatprep.subr.bf16.mxu0 0
    %1194 = vmatpush1.bf16.msra.mxu0 0
    %1195 = vmatprep.subr.bf16.mxu0 0
    %1196 = vmatpush1.bf16.msra.mxu0 0
    %1197 = vmatprep.mubr.bf16.mxu0 0
    %1198 = vmatmul.mubr.bf16.gmra.mrb[0].mxu0 %v1096
    %v1199 = vpop.f32.mrb[0].mxu0
    %v1200 = vadd.f32 %v1116, %v1199
    %v1201 = vpop.f32.mrb[0].mxu0
    %v1202 = vpop.f32.mrb[0].mxu0
    %v1203 = vadd.f32 %v1116, %v1202
    %v1204 = vpop.f32.mrb[0].mxu0
    %1205 = vdwg.mxu0
    %v1206 = vpack.c.bf16 %v1203, %v1200
    %v1207 = vld [vmem:[#allocation16] sm:$0xff]
    %v1208 = vld [vmem:[#allocation16 + $0x8] sm:$0xff]
    %v1209 = vld [vmem:[#allocation16 + $0x10] sm:$0xff]
    %v1210 = vld [vmem:[#allocation16 + $0x18] sm:$0xff]
    %v1211 = vld [vmem:[#allocation16 + $0x20] sm:$0xff]
    %v1212 = vld [vmem:[#allocation16 + $0x28] sm:$0xff]
    %v1213 = vld [vmem:[#allocation16 + $0x30] sm:$0xff]
    %v1214 = vld [vmem:[#allocation16 + $0x38] sm:$0xff]
    %v1215 = vld [vmem:[#allocation16 + $0x40] sm:$0xff]
    %v1216 = vld [vmem:[#allocation16 + $0x48] sm:$0xff]
    %v1217 = vld [vmem:[#allocation16 + $0x50] sm:$0xff]
    %v1218 = vld [vmem:[#allocation16 + $0x58] sm:$0xff]
    %v1219 = vld [vmem:[#allocation16 + $0x60] sm:$0xff]
    %v1220 = vld [vmem:[#allocation16 + $0x68] sm:$0xff]
    %v1221 = vld [vmem:[#allocation16 + $0x70] sm:$0xff]
    %v1222 = vld [vmem:[#allocation16 + $0x78] sm:$0xff]
    %v1239 = vunpack.c.l.b16 %v1207
    %v1240 = vunpack.c.h.b16 %v1207
    %v1241 = vunpack.c.l.b16 %v1208
    %v1242 = vunpack.c.h.b16 %v1208
    %v1243 = vunpack.c.l.b16 %v1209
    %v1244 = vunpack.c.h.b16 %v1209
    %v1245 = vunpack.c.l.b16 %v1210
    %v1246 = vunpack.c.h.b16 %v1210
    %v1247 = vunpack.c.l.b16 %v1211
    %v1248 = vunpack.c.h.b16 %v1211
    %v1249 = vunpack.c.l.b16 %v1212
    %v1250 = vunpack.c.h.b16 %v1212
    %v1251 = vunpack.c.l.b16 %v1213
    %v1252 = vunpack.c.h.b16 %v1213
    %v1253 = vunpack.c.l.b16 %v1214
    %v1254 = vunpack.c.h.b16 %v1214
    %v1255 = vunpack.c.l.b16 %v1215
    %v1256 = vunpack.c.h.b16 %v1215
    %v1257 = vunpack.c.l.b16 %v1216
    %v1258 = vunpack.c.h.b16 %v1216
    %v1259 = vunpack.c.l.b16 %v1217
    %v1260 = vunpack.c.h.b16 %v1217
    %v1261 = vunpack.c.l.b16 %v1218
    %v1262 = vunpack.c.h.b16 %v1218
    %v1263 = vunpack.c.l.b16 %v1219
    %v1264 = vunpack.c.h.b16 %v1219
    %v1265 = vunpack.c.l.b16 %v1220
    %v1266 = vunpack.c.h.b16 %v1220
    %v1267 = vunpack.c.l.b16 %v1221
    %v1268 = vunpack.c.h.b16 %v1221
    %v1269 = vunpack.c.l.b16 %v1222
    %v1270 = vunpack.c.h.b16 %v1222
    %v1271 = vpack.c.b16 %v1241, %v1239
    %v1272 = vpack.c.b16 %v1242, %v1240
    %v1273 = vpack.c.b16 %v1245, %v1243
    %v1274 = vpack.c.b16 %v1246, %v1244
    %v1275 = vpack.c.b16 %v1249, %v1247
    %v1276 = vpack.c.b16 %v1250, %v1248
    %v1277 = vpack.c.b16 %v1253, %v1251
    %v1278 = vpack.c.b16 %v1254, %v1252
    %v1279 = vpack.c.b16 %v1257, %v1255
    %v1280 = vpack.c.b16 %v1258, %v1256
    %v1281 = vpack.c.b16 %v1261, %v1259
    %v1282 = vpack.c.b16 %v1262, %v1260
    %v1283 = vpack.c.b16 %v1265, %v1263
    %v1284 = vpack.c.b16 %v1266, %v1264
    %v1285 = vpack.c.b16 %v1269, %v1267
    %v1286 = vpack.c.b16 %v1270, %v1268
    %1303 = vmatprep.subr.bf16.mxu0 %v1272
    %1304 = vmatpush1.bf16.msra.mxu0 %v1271
    %1305 = vmatprep.subr.bf16.mxu0 %v1274
    %1306 = vmatpush1.bf16.msra.mxu0 %v1273
    %1307 = vmatprep.subr.bf16.mxu0 %v1276
    %1308 = vmatpush1.bf16.msra.mxu0 %v1275
    %1309 = vmatprep.subr.bf16.mxu0 %v1278
    %1310 = vmatpush1.bf16.msra.mxu0 %v1277
    %1311 = vmatprep.subr.bf16.mxu0 %v1280
    %1312 = vmatpush1.bf16.msra.mxu0 %v1279
    %1313 = vmatprep.subr.bf16.mxu0 %v1282
    %1314 = vmatpush1.bf16.msra.mxu0 %v1281
    %1315 = vmatprep.subr.bf16.mxu0 %v1284
    %1316 = vmatpush1.bf16.msra.mxu0 %v1283
    %1317 = vmatprep.subr.bf16.mxu0 %v1286
    %1318 = vmatpush1.bf16.msra.mxu0 %v1285
    %1319 = vmatprep.subr.bf16.mxu0 0
    %1320 = vmatpush1.bf16.msra.mxu0 0
    %1321 = vmatprep.subr.bf16.mxu0 0
    %1322 = vmatpush1.bf16.msra.mxu0 0
    %1323 = vmatprep.subr.bf16.mxu0 0
    %1324 = vmatpush1.bf16.msra.mxu0 0
    %1325 = vmatprep.subr.bf16.mxu0 0
    %1326 = vmatpush1.bf16.msra.mxu0 0
    %1327 = vmatprep.subr.bf16.mxu0 0
    %1328 = vmatpush1.bf16.msra.mxu0 0
    %1329 = vmatprep.subr.bf16.mxu0 0
    %1330 = vmatpush1.bf16.msra.mxu0 0
    %1331 = vmatprep.subr.bf16.mxu0 0
    %1332 = vmatpush1.bf16.msra.mxu0 0
    %1333 = vmatprep.subr.bf16.mxu0 0
    %1334 = vmatpush1.bf16.msra.mxu0 0
    %1335 = vmatprep.mubr.bf16.mxu0 0
    %1336 = vmatmul.mubr.bf16.gmra.mrb[0].mxu0 %v1206
    %v1337 = vpop.f32.mrb[0].mxu0
    %v1338 = vadd.f32 0.0, %v1337
    %v1339 = vpop.f32.mrb[0].mxu0
    %v1340 = vadd.f32 0.0, %v1339
    %v1341 = vpop.f32.mrb[0].mxu0
    %v1342 = vadd.f32 0.0, %v1341
    %v1343 = vpop.f32.mrb[0].mxu0
    %v1344 = vadd.f32 0.0, %v1343
    %1345 = vdwg.mxu0
    %v1346 = vlaneseq
    %v1347 = vshrl.u32 %v1346, 7
    %v1348 = vsub.s32 6, %v1347
    %v1349 = vrot.slane %v176, %v1348
    %v1350 = vadd.f32 %v1338, %v1349
    %v1351 = vadd.f32 %v1342, %v1349
    %v1352 = vlaneseq
    %v1353 = vshrl.u32 %v1352, 7
    %v1354 = vsub.s32 7, %v1353
    %v1355 = vrot.slane %v176, %v1354
    %v1356 = vadd.f32 %v1340, %v1355
    %v1357 = vadd.f32 %v1344, %v1355
    %v1358 = vxor.u32 %v1356, 2147483648
    %v1359 = vxor.u32 %v1357, 2147483648
    %v1360 = vmul.f32 %v1358, 1.442695
    %v1361 = vpow.pop %v1360
    %v1362 = vmul.f32 %v1359, 1.442695
    %v1363 = vpow.pop %v1362
    %v1364 = vadd.f32 %v1361, 1.0
    %v1365 = vadd.f32 %v1363, 1.0
    %v1366 = vrcp.pop %v1364
    %v1367 = vmul.f32 1.0, %v1366
    %v1368 = vrcp.pop %v1365
    %v1369 = vmul.f32 1.0, %v1368
    %v1370 = vmul.f32 %v1350, %v1367
    %v1371 = vmul.f32 %v1351, %v1369
    %v1372 = vadd.f32 %v1370, %v972
    %v1373 = vadd.f32 %v1371, %v973
    %1374 = vadd.xlane.f32.xlu0 %v1372
    %v1375 = vpop.xlane.xlu0 %1374
    %1376 = vadd.xlane.f32.xlu0 %v1373
    %v1377 = vpop.xlane.xlu0 %1376
    %v1378 = vmul.f32 %v1375, %v943
    %v1379 = vmul.f32 %v1377, %v943
    %v1380 = vsub.f32 %v1372, %v1378
    %v1381 = vsub.f32 %v1373, %v1379
    %v1382 = vmul.f32 %v1380, %v1380
    %v1383 = vmul.f32 %v1381, %v1381
    %1384 = vadd.xlane.f32.xlu0 %v1382
    %v1385 = vpop.xlane.xlu0 %1384
    %1386 = vadd.xlane.f32.xlu0 %v1383
    %v1387 = vpop.xlane.xlu0 %1386
    %v1388 = vmul.f32 %v1385, %v943
    %v1389 = vmul.f32 %v1387, %v943
    %v1390 = vadd.f32 %v1388, 1e-05
    %v1391 = vadd.f32 %v1389, 1e-05
    %v1392 = vrsqrt.pop %v1390
    %v1393 = vrsqrt.pop %v1391
    %v1394 = vmul.f32 %v1380, %v1392
    %v1395 = vmul.f32 %v1381, %v1393
    %v1396 = vlaneseq
    %v1397 = vshrl.u32 %v1396, 7
    %v1398 = vsub.s32 0, %v1397
    %v1399 = vrot.slane %v177, %v1398
    %v1400 = vmul.f32 %v1394, %v1399
    %v1401 = vmul.f32 %v1395, %v1399
    %v1402 = vlaneseq
    %v1403 = vshrl.u32 %v1402, 7
    %v1404 = vsub.s32 1, %v1403
    %v1405 = vrot.slane %v177, %v1404
    %v1406 = vadd.f32 %v1400, %v1405
    %v1407 = vadd.f32 %v1401, %v1405
    %v1408 = vpack.c.bf16 %v1407, %v1406
    %v1409 = vld [vmem:[#allocation18] sm:$0xff]
    %v1410 = vld [vmem:[#allocation18 + $0x8] sm:$0xff]
    %v1411 = vld [vmem:[#allocation18 + $0x10] sm:$0xff]
    %v1412 = vld [vmem:[#allocation18 + $0x18] sm:$0xff]
    %v1413 = vld [vmem:[#allocation18 + $0x20] sm:$0xff]
    %v1414 = vld [vmem:[#allocation18 + $0x28] sm:$0xff]
    %v1415 = vld [vmem:[#allocation18 + $0x30] sm:$0xff]
    %v1416 = vld [vmem:[#allocation18 + $0x38] sm:$0xff]
    %v1417 = vld [vmem:[#allocation18 + $0x40] sm:$0xff]
    %v1418 = vld [vmem:[#allocation18 + $0x48] sm:$0xff]
    %v1419 = vld [vmem:[#allocation18 + $0x50] sm:$0xff]
    %v1420 = vld [vmem:[#allocation18 + $0x58] sm:$0xff]
    %v1421 = vld [vmem:[#allocation18 + $0x60] sm:$0xff]
    %v1422 = vld [vmem:[#allocation18 + $0x68] sm:$0xff]
    %v1423 = vld [vmem:[#allocation18 + $0x70] sm:$0xff]
    %v1424 = vld [vmem:[#allocation18 + $0x78] sm:$0xff]
    %v1441 = vunpack.c.l.b16 %v1409
    %v1442 = vunpack.c.h.b16 %v1409
    %v1443 = vunpack.c.l.b16 %v1410
    %v1444 = vunpack.c.h.b16 %v1410
    %v1445 = vunpack.c.l.b16 %v1411
    %v1446 = vunpack.c.h.b16 %v1411
    %v1447 = vunpack.c.l.b16 %v1412
    %v1448 = vunpack.c.h.b16 %v1412
    %v1449 = vunpack.c.l.b16 %v1413
    %v1450 = vunpack.c.h.b16 %v1413
    %v1451 = vunpack.c.l.b16 %v1414
    %v1452 = vunpack.c.h.b16 %v1414
    %v1453 = vunpack.c.l.b16 %v1415
    %v1454 = vunpack.c.h.b16 %v1415
    %v1455 = vunpack.c.l.b16 %v1416
    %v1456 = vunpack.c.h.b16 %v1416
    %v1457 = vunpack.c.l.b16 %v1417
    %v1458 = vunpack.c.h.b16 %v1417
    %v1459 = vunpack.c.l.b16 %v1418
    %v1460 = vunpack.c.h.b16 %v1418
    %v1461 = vunpack.c.l.b16 %v1419
    %v1462 = vunpack.c.h.b16 %v1419
    %v1463 = vunpack.c.l.b16 %v1420
    %v1464 = vunpack.c.h.b16 %v1420
    %v1465 = vunpack.c.l.b16 %v1421
    %v1466 = vunpack.c.h.b16 %v1421
    %v1467 = vunpack.c.l.b16 %v1422
    %v1468 = vunpack.c.h.b16 %v1422
    %v1469 = vunpack.c.l.b16 %v1423
    %v1470 = vunpack.c.h.b16 %v1423
    %v1471 = vunpack.c.l.b16 %v1424
    %v1472 = vunpack.c.h.b16 %v1424
    %v1473 = vpack.c.b16 %v1443, %v1441
    %v1474 = vpack.c.b16 %v1444, %v1442
    %v1475 = vpack.c.b16 %v1447, %v1445
    %v1476 = vpack.c.b16 %v1448, %v1446
    %v1477 = vpack.c.b16 %v1451, %v1449
    %v1478 = vpack.c.b16 %v1452, %v1450
    %v1479 = vpack.c.b16 %v1455, %v1453
    %v1480 = vpack.c.b16 %v1456, %v1454
    %v1481 = vpack.c.b16 %v1459, %v1457
    %v1482 = vpack.c.b16 %v1460, %v1458
    %v1483 = vpack.c.b16 %v1463, %v1461
    %v1484 = vpack.c.b16 %v1464, %v1462
    %v1485 = vpack.c.b16 %v1467, %v1465
    %v1486 = vpack.c.b16 %v1468, %v1466
    %v1487 = vpack.c.b16 %v1471, %v1469
    %v1488 = vpack.c.b16 %v1472, %v1470
    %1505 = vmatprep.subr.bf16.mxu0 %v1474
    %1506 = vmatpush1.bf16.msra.mxu0 %v1473
    %1507 = vmatprep.subr.bf16.mxu0 %v1476
    %1508 = vmatpush1.bf16.msra.mxu0 %v1475
    %1509 = vmatprep.subr.bf16.mxu0 %v1478
    %1510 = vmatpush1.bf16.msra.mxu0 %v1477
    %1511 = vmatprep.subr.bf16.mxu0 %v1480
    %1512 = vmatpush1.bf16.msra.mxu0 %v1479
    %1513 = vmatprep.subr.bf16.mxu0 %v1482
    %1514 = vmatpush1.bf16.msra.mxu0 %v1481
    %1515 = vmatprep.subr.bf16.mxu0 %v1484
    %1516 = vmatpush1.bf16.msra.mxu0 %v1483
    %1517 = vmatprep.subr.bf16.mxu0 %v1486
    %1518 = vmatpush1.bf16.msra.mxu0 %v1485
    %1519 = vmatprep.subr.bf16.mxu0 %v1488
    %1520 = vmatpush1.bf16.msra.mxu0 %v1487
    %1521 = vmatprep.subr.bf16.mxu0 0
    %1522 = vmatpush1.bf16.msra.mxu0 0
    %1523 = vmatprep.subr.bf16.mxu0 0
    %1524 = vmatpush1.bf16.msra.mxu0 0
    %1525 = vmatprep.subr.bf16.mxu0 0
    %1526 = vmatpush1.bf16.msra.mxu0 0
    %1527 = vmatprep.subr.bf16.mxu0 0
    %1528 = vmatpush1.bf16.msra.mxu0 0
    %1529 = vmatprep.subr.bf16.mxu0 0
    %1530 = vmatpush1.bf16.msra.mxu0 0
    %1531 = vmatprep.subr.bf16.mxu0 0
    %1532 = vmatpush1.bf16.msra.mxu0 0
    %1533 = vmatprep.subr.bf16.mxu0 0
    %1534 = vmatpush1.bf16.msra.mxu0 0
    %1535 = vmatprep.subr.bf16.mxu0 0
    %1536 = vmatpush1.bf16.msra.mxu0 0
    %1537 = vmatprep.mubr.bf16.mxu0 0
    %1538 = vmatmul.mubr.bf16.gmra.mrb[0].mxu0 %v1408
    %v1539 = vpop.f32.mrb[0].mxu0
    %v1540 = vadd.f32 0.0, %v1539
    %v1541 = vpop.f32.mrb[0].mxu0
    %v1542 = vadd.f32 0.0, %v1541
    %v1543 = vpop.f32.mrb[0].mxu0
    %v1544 = vadd.f32 0.0, %v1543
    %v1545 = vpop.f32.mrb[0].mxu0
    %v1546 = vadd.f32 0.0, %v1545
    %1547 = vdwg.mxu0
    %v1548 = vlaneseq
    %v1549 = vshrl.u32 %v1548, 7
    %v1550 = vsub.s32 2, %v1549
    %v1551 = vrot.slane %v177, %v1550
    %v1552 = vadd.f32 %v1540, %v1551
    %v1553 = vadd.f32 %v1544, %v1551
    %v1554 = vlaneseq
    %v1555 = vshrl.u32 %v1554, 7
    %v1556 = vsub.s32 3, %v1555
    %v1557 = vrot.slane %v177, %v1556
    %v1558 = vadd.f32 %v1542, %v1557
    %v1559 = vadd.f32 %v1546, %v1557
    %v1560 = vxor.u32 %v1558, 2147483648
    %v1561 = vxor.u32 %v1559, 2147483648
    %v1562 = vmul.f32 %v1560, 1.442695
    %v1563 = vpow.pop %v1562
    %v1564 = vmul.f32 %v1561, 1.442695
    %v1565 = vpow.pop %v1564
    %v1566 = vadd.f32 %v1563, 1.0
    %v1567 = vadd.f32 %v1565, 1.0
    %v1568 = vrcp.pop %v1566
    %v1569 = vmul.f32 1.0, %v1568
    %v1570 = vrcp.pop %v1567
    %v1571 = vmul.f32 1.0, %v1570
    %v1572 = vmul.f32 %v1552, %v1569
    %v1573 = vmul.f32 %v1553, %v1571
    %v1574 = vadd.f32 %v1572, %v174
    %v1575 = vadd.f32 %v1573, %v175
    %1576 = vadd.xlane.f32.xlu0 %v1574
    %v1577 = vpop.xlane.xlu0 %1576
    %1578 = vadd.xlane.f32.xlu0 %v1575
    %v1579 = vpop.xlane.xlu0 %1578
    %v1580 = vmul.f32 %v1577, %v943
    %v1581 = vmul.f32 %v1579, %v943
    %v1582 = vsub.f32 %v1574, %v1580
    %v1583 = vsub.f32 %v1575, %v1581
    %v1584 = vmul.f32 %v1582, %v1582
    %v1585 = vmul.f32 %v1583, %v1583
    %1586 = vadd.xlane.f32.xlu0 %v1584
    %v1587 = vpop.xlane.xlu0 %1586
    %1588 = vadd.xlane.f32.xlu0 %v1585
    %v1589 = vpop.xlane.xlu0 %1588
    %v1590 = vmul.f32 %v1587, %v943
    %v1591 = vmul.f32 %v1589, %v943
    %v1592 = vadd.f32 %v1590, 1e-05
    %v1593 = vadd.f32 %v1591, 1e-05
    %v1594 = vrsqrt.pop %v1592
    %v1595 = vrsqrt.pop %v1593
    %v1596 = vmul.f32 %v1582, %v1594
    %v1597 = vmul.f32 %v1583, %v1595
    %v1598 = vlaneseq
    %v1599 = vshrl.u32 %v1598, 7
    %v1600 = vsub.s32 4, %v1599
    %v1601 = vrot.slane %v177, %v1600
    %v1602 = vmul.f32 %v1596, %v1601
    %v1603 = vmul.f32 %v1597, %v1601
    %v1604 = vlaneseq
    %v1605 = vshrl.u32 %v1604, 7
    %v1606 = vsub.s32 5, %v1605
    %v1607 = vrot.slane %v177, %v1606
    %v1608 = vadd.f32 %v1602, %v1607
    %v1609 = vadd.f32 %v1603, %v1607
    %1610 = vst [vmem:[#allocation19] sm:$0xff] %v1608
    %1611 = vst [vmem:[#allocation19 + $0x8] sm:$0xff] %v1609
    // Predicated region
    $region78: #{tpu_custom_call.1} parent=1 // pred_check
      _
    $region79: #{tpu_custom_call.1} parent=1 // pred_check_branch
      %1613 = sbr.rel (0) target = $region81
    $region80: #{tpu_custom_call.1} parent=1 // pred_region
      %s1615 = ssub.s32 256, 256
      %1616 = vsyncadd [#allocation6], %s1615
      %s1617 = sshll.u32 [#allocation19], 4
      %s1618 = int_to_ptr.vmem [resolvable:$true] %s1617
      %1623 = dma.vmem_to_hbm [thread:$0]  %s1618, 256, %s11, [#allocation6], 128, 128, 8
    $region81: #{tpu_custom_call.1} parent=1 // pred_fallthru
      _
    // Predicated region
    $region82: #{tpu_custom_call.1} parent=1 // pred_check
      _
    $region83: #{tpu_custom_call.1} parent=1 // pred_check_branch
      %1625 = sbr.rel (0) target = $region85
    $region84: #{tpu_custom_call.1} parent=1 // pred_region
      %s1627 = ssub.s32 256, 256
      %1628 = vsyncadd [#allocation21], %s1627
      %s1629 = sshll.u32 [#allocation20], 4
      %s1630 = int_to_ptr.vmem [resolvable:$true] %s1629
      %1635 = dma.vmem_to_hbm [thread:$0]  %s1630, 256, %s12, [#allocation21], 128, 128, 8
    $region85: #{tpu_custom_call.1} parent=1 // pred_fallthru
      _
    // Predicated region
    $region86: #{tpu_custom_call.1} parent=1 // pred_check
      _
    $region87: #{tpu_custom_call.1} parent=1 // pred_check_branch
      %1637 = sbr.rel (0) target = $region89
    $region88: #{tpu_custom_call.1} parent=1 // pred_region
      %1638 = dma.done [#allocation6], 256
    $region89: #{tpu_custom_call.1} parent=1 // pred_fallthru
      _
    // Predicated region
    $region90: #{tpu_custom_call.1} parent=1 // pred_check
      _
    $region91: #{tpu_custom_call.1} parent=1 // pred_check_branch
      %1640 = sbr.rel (0) target = $region93
    $region92: #{tpu_custom_call.1} parent=1 // pred_region
      %1641 = dma.done [#allocation21], 256
    $region93: #{tpu_custom_call.1} parent=1 // pred_fallthru
      _
    %1642 = vsyncpa [#allocation5], 1
    %1643 = vsyncpa [#allocation8], 1
    %1644 = vsyncpa [#allocation11], 1
    %1645 = vsyncpa [#allocation14], 1
    %1646 = vsyncpa [#allocation17], 1
    %1647 = vsyncpa [#allocation6], 1
    %1648 = vsyncpa [#allocation21], 1

</llo_original>
